<compile_context>
chip_gen: v6e
topology: v6e:2x2x1
jax: 0.10.0
libtpu: 0.0.40
codegen_flags: <defaults>
</compile_context>

<pallas_src>
import functools

import jax
import jax.numpy as jnp
import numpy as np
from jax.experimental import pallas as pl
from jax.experimental.pallas import tpu as pltpu

_BN_EPS = 1e-5
# (dy, dx) tap order == (ky, kx) row-major == weight column-block order.
_TAP_OFFSETS = tuple((dy, dx) for dy in (-1, 0, 1) for dx in (-1, 0, 1))


def _round_up(n, m):
    return ((n + m - 1) // m) * m


def _unit_plan(in_c, ch, num_memblock, num_resblock):
    """Static layout of every BNReLUConv unit, in network-execution order.

    plan[i] = (cin, cout, ksize, gamma_row_offset); unit i's weight lives in
    slot i of the packed weight slab.  gamma/beta offsets are 8-row aligned so
    in-kernel slices are f32-sublane-tile aligned.
    """
    plan = []
    off = 0

    def add(cin, cout, k):
        nonlocal off
        plan.append((cin, cout, k, off))
        off += _round_up(cin, 8)

    add(in_c, ch, 3)                                        # feature extractor
    for i in range(num_memblock):
        for _ in range(num_resblock):
            add(ch, ch, 3)                                  # ResidualBlock conv1
            add(ch, ch, 3)                                  # ResidualBlock conv2
        add((num_resblock + i + 1) * ch, ch, 1)             # gate unit (1x1)
    add(ch, in_c, 3)                                        # reconstructor
    return tuple(plan), off


# ---------------------------------------------------------------------------
# Parameter construction + host-side packing (deterministic, synthetic).
# ---------------------------------------------------------------------------
def init_memnet_params(key, in_c, ch, num_memblock, num_resblock):
    """One dict per BNReLUConv unit: 'w' HWIO (k,k,cin,cout), gamma/beta (cin,)."""
    plan, _ = _unit_plan(in_c, ch, num_memblock, num_resblock)
    unit_keys = jax.random.split(key, len(plan))
    units = []
    for (cin, cout, k, _), ukey in zip(plan, unit_keys):
        kg, kb, kw = jax.random.split(ukey, 3)
        units.append(dict(
            gamma=1.0 + 0.1 * jax.random.normal(kg, (cin,), jnp.float32),
            beta=0.1 * jax.random.normal(kb, (cin,), jnp.float32),
            w=jax.random.normal(kw, (k, k, cin, cout), jnp.float32)
              / np.sqrt(float(k * k * cin)),
        ))
    return units


def pack_memnet_params(units, in_c, ch, num_memblock, num_resblock):
    """Pack ALL parameters into 3 arrays (done once, host-side):
       * w_slab  (n_units, max_cout, 128) bf16 — each conv weight pre-transposed
         to matmul form (Cout, K*K*Cin), zero-padded.
       * gamma / beta (total_rows, 1) f32 column vectors, 8-row aligned/unit.
    """
    plan, g_rows = _unit_plan(in_c, ch, num_memblock, num_resblock)
    slot_rows = max(cout for _, cout, _, _ in plan)
    slot_cols = _round_up(max(k * k * cin for cin, _, k, _ in plan), 128)
    w_slab = np.zeros((len(plan), slot_rows, slot_cols), np.float32)
    g_slab = np.zeros((g_rows, 1), np.float32)
    b_slab = np.zeros((g_rows, 1), np.float32)
    for slot, ((cin, cout, k, goff), u) in enumerate(zip(plan, units)):
        wmat = np.transpose(np.asarray(u["w"]), (3, 0, 1, 2)).reshape(cout, k * k * cin)
        w_slab[slot, :cout, :k * k * cin] = wmat
        g_slab[goff:goff + cin, 0] = np.asarray(u["gamma"])
        b_slab[goff:goff + cin, 0] = np.asarray(u["beta"])
    return (jnp.asarray(w_slab, jnp.bfloat16),
            jnp.asarray(g_slab, jnp.float32),
            jnp.asarray(b_slab, jnp.float32))


def _build_tap_masks(N, H, W):
    """(9, N*H*W) 0/1 f32 masks: tap (dy,dx) is valid where the shifted source
    pixel lies inside the image (implements pad=1 zeros and stops roll
    wrap-around across rows / batch images)."""
    hh, ww = np.meshgrid(np.arange(H), np.arange(W), indexing="ij")
    rows = []
    for dy, dx in _TAP_OFFSETS:
        ok = (hh + dy >= 0) & (hh + dy < H) & (ww + dx >= 0) & (ww + dx < W)
        rows.append(np.tile(ok.reshape(-1), N))
    return np.stack(rows, axis=0).astype(np.float32)


# ---------------------------------------------------------------------------
# The fused whole-network kernel (channel-major: activations are (C, M)).
# ---------------------------------------------------------------------------
def _memnet_kernel(x_ref, w_ref, g_ref, b_ref, mask_ref, o_ref, *,
                   plan, N, H, W, num_memblock, num_resblock):
    M = N * H * W
    inv_m = 1.0 / M
    masks = mask_ref[...]                        # (9, M) f32, stays in vregs

    def bn_relu(a, goff, cin):
        # torch train-mode BatchNorm2d (biased batch variance) + ReLU, in f32.
        # Two-pass (mean, then centered variance) for numerical robustness.
        gamma = g_ref[goff:goff + cin, :]        # (cin, 1)
        beta = b_ref[goff:goff + cin, :]
        mean = jnp.sum(a, axis=1, keepdims=True) * inv_m
        cent = a - mean
        var = jnp.sum(cent * cent, axis=1, keepdims=True) * inv_m
        return jnp.maximum(cent * (jax.lax.rsqrt(var + _BN_EPS) * gamma) + beta,
                           0.0)

    def conv3x3(y, slot, cout):
        # 3x3 / stride 1 / pad 1 conv: 9 lane-rotated taps (XLU roll) masked at
        # the image boundary, stacked along the sublane (contraction) axis and
        # cast ONCE to bf16 -> one MXU matmul with K = 9*cin.
        cin = y.shape[0]
        taps = []
        for ti, (dy, dx) in enumerate(_TAP_OFFSETS):
            off = dy * W + dx
            if off == 0:
                taps.append(y)                   # center tap: no shift, no mask
            else:
                taps.append(pltpu.roll(y, (-off) % M, 1) * masks[ti:ti + 1, :])
        patch = jnp.concatenate(taps, axis=0).astype(jnp.bfloat16)  # (9*cin, M)
        wmat = w_ref[slot, 0:cout, 0:9 * cin]    # bf16, pre-packed host-side
        return jnp.dot(wmat, patch, preferred_element_type=jnp.float32)

    def conv1x1(y, slot, cout):
        cin = y.shape[0]
        wmat = w_ref[slot, 0:cout, 0:cin]
        return jnp.dot(wmat, y.astype(jnp.bfloat16),
                       preferred_element_type=jnp.float32)

    def brc(a, unit):                            # BNReLUConv
        cin, cout, k, goff = plan[unit]
        y = bn_relu(a, goff, cin)
        return conv3x3(y, unit, cout) if k == 3 else conv1x1(y, unit, cout)

    x = x_ref[...]                               # (in_c, M) f32
    unit = 0
    out = brc(x, unit); unit += 1                # feature extractor
    ys = [out]                                   # long-term memory (vreg-resident)
    for _ in range(num_memblock):
        cur = out
        xs = []                                  # short-term memory
        for _ in range(num_resblock):
            t = brc(cur, unit); unit += 1
            t = brc(t, unit); unit += 1
            cur = t + cur                        # ResidualBlock skip
            xs.append(cur)
        cat = jnp.concatenate(xs + ys, axis=0)   # channel concat == sublane stack
        out = brc(cat, unit); unit += 1          # gate unit: ONE K=n_seg*ch matmul
        ys.append(out)
    rec = brc(out, unit); unit += 1              # reconstructor
    o_ref[...] = rec + x                         # global residual, lane-dense store


def memnet_forward(x_nchw, w_slab, gamma_slab, beta_slab, *, channels,
                   num_memblock, num_resblock):
    """Full MemNet forward.  x is NCHW (like the PyTorch module); the kernel
    runs channel-major (C, N*H*W) with a lane-dense (in_c, M) f32 output that
    is transposed back to NCHW here, outside the kernel."""
    N, in_c, H, W = x_nchw.shape
    M = N * H * W
    plan, _ = _unit_plan(in_c, channels, num_memblock, num_resblock)
    x_cm = x_nchw.astype(jnp.float32).transpose(1, 0, 2, 3).reshape(in_c, M)
    tap_masks = jnp.asarray(_build_tap_masks(N, H, W))    # compile-time constant
    kernel = functools.partial(
        _memnet_kernel, plan=plan, N=N, H=H, W=W,
        num_memblock=num_memblock, num_resblock=num_resblock)
    out_cm = pl.pallas_call(
        kernel,
        out_shape=jax.ShapeDtypeStruct((in_c, M), jnp.float32),
    )(x_cm, w_slab, gamma_slab, beta_slab, tap_masks)
    return out_cm.reshape(in_c, N, H, W).transpose(1, 0, 2, 3)


if __name__ == "__main__":
    # MemNet(in_channels=4, channels=8, num_memblock=2, num_resblock=2)
    # on a (2, 4, 8, 8) NCHW input (same sizes as the PyTorch module call).
    IN_C, CH, NUM_MEM, NUM_RES = 4, 8, 2, 2
    N, H, W = 2, 8, 8

    key = jax.random.PRNGKey(0)
    kx, kp = jax.random.split(key)
    x = jax.random.normal(kx, (N, IN_C, H, W), jnp.float32)
    units = init_memnet_params(kp, IN_C, CH, NUM_MEM, NUM_RES)
    w_slab, g_slab, b_slab = pack_memnet_params(units, IN_C, CH, NUM_MEM, NUM_RES)

    fwd = jax.jit(functools.partial(
        memnet_forward, channels=CH, num_memblock=NUM_MEM, num_resblock=NUM_RES))
    y = fwd(x, w_slab, g_slab, b_slab)
    jax.block_until_ready(y)

    assert y.shape == (N, IN_C, H, W), y.shape
    assert bool(jnp.all(jnp.isfinite(y)))
    print("KERNEL_OK")
</pallas_src>

<mosaic_0001>
module attributes {stable_mosaic.version = 11 : i64} {
  func.func @_memnet_kernel(%arg0: memref<4x128xf32, #tpu.memory_space<vmem>>, %arg1: memref<12x8x128xbf16, #tpu.memory_space<vmem>>, %arg2: memref<136x1xf32, #tpu.memory_space<vmem>>, %arg3: memref<136x1xf32, #tpu.memory_space<vmem>>, %arg4: memref<9x128xf32, #tpu.memory_space<vmem>>, %arg5: memref<4x128xf32, #tpu.memory_space<vmem>>) attributes {dimension_semantics = [], scalar_prefetch = 0 : i64, scratch_operands = 0 : i64, tpu.core_type = #tpu.core_type<tc>} {
    %c0 = arith.constant 0 : index
    %c0_0 = arith.constant 0 : index
    %0 = vector.load %arg4[%c0, %c0_0] : memref<9x128xf32, #tpu.memory_space<vmem>>, vector<9x128xf32>
    %c0_1 = arith.constant 0 : index
    %c0_2 = arith.constant 0 : index
    %1 = vector.load %arg0[%c0_1, %c0_2] : memref<4x128xf32, #tpu.memory_space<vmem>>, vector<4x128xf32>
    %c0_3 = arith.constant 0 : index
    %c0_4 = arith.constant 0 : index
    %2 = vector.load %arg2[%c0_3, %c0_4] : memref<136x1xf32, #tpu.memory_space<vmem>>, vector<4x1xf32>
    %c0_5 = arith.constant 0 : index
    %c0_6 = arith.constant 0 : index
    %3 = vector.load %arg3[%c0_5, %c0_6] : memref<136x1xf32, #tpu.memory_space<vmem>>, vector<4x1xf32>
    %cst = arith.constant dense<0.000000e+00> : vector<4xf32>
    %4 = vector.multi_reduction <add>, %1, %cst [1] : vector<4x128xf32> to vector<4xf32>
    %5 = vector.shape_cast %4 : vector<4xf32> to vector<4x1xf32>
    %cst_7 = arith.constant 7.812500e-03 : f32
    %6 = vector.broadcast %cst_7 : f32 to vector<4x1xf32>
    %7 = arith.mulf %5, %6 : vector<4x1xf32>
    %8 = vector.broadcast %7 : vector<4x1xf32> to vector<4x128xf32>
    %9 = arith.subf %1, %8 : vector<4x128xf32>
    %10 = arith.mulf %9, %9 : vector<4x128xf32>
    %cst_8 = arith.constant dense<0.000000e+00> : vector<4xf32>
    %11 = vector.multi_reduction <add>, %10, %cst_8 [1] : vector<4x128xf32> to vector<4xf32>
    %12 = vector.shape_cast %11 : vector<4xf32> to vector<4x1xf32>
    %cst_9 = arith.constant 7.812500e-03 : f32
    %13 = vector.broadcast %cst_9 : f32 to vector<4x1xf32>
    %14 = arith.mulf %12, %13 : vector<4x1xf32>
    %cst_10 = arith.constant 9.99999974E-6 : f32
    %15 = vector.broadcast %cst_10 : f32 to vector<4x1xf32>
    %16 = arith.addf %14, %15 : vector<4x1xf32>
    %17 = math.rsqrt %16 : vector<4x1xf32>
    %18 = arith.mulf %17, %2 : vector<4x1xf32>
    %19 = vector.broadcast %18 : vector<4x1xf32> to vector<4x128xf32>
    %20 = arith.mulf %9, %19 : vector<4x128xf32>
    %21 = vector.broadcast %3 : vector<4x1xf32> to vector<4x128xf32>
    %22 = arith.addf %20, %21 : vector<4x128xf32>
    %cst_11 = arith.constant 0.000000e+00 : f32
    %23 = vector.broadcast %cst_11 : f32 to vector<4x128xf32>
    %24 = arith.maximumf %22, %23 : vector<4x128xf32>
    %c9_i32 = arith.constant 9 : i32
    %25 = tpu.dynamic_rotate %24 by %c9_i32 dim 1 : vector<4x128xf32>, i32 -> vector<4x128xf32>
    %26 = vector.extract_strided_slice %0 {offsets = [0, 0], sizes = [1, 128], strides = [1, 1]} : vector<9x128xf32> to vector<1x128xf32>
    %27 = vector.broadcast %26 : vector<1x128xf32> to vector<4x128xf32>
    %28 = arith.mulf %25, %27 : vector<4x128xf32>
    %c8_i32 = arith.constant 8 : i32
    %29 = tpu.dynamic_rotate %24 by %c8_i32 dim 1 : vector<4x128xf32>, i32 -> vector<4x128xf32>
    %30 = vector.extract_strided_slice %0 {offsets = [1, 0], sizes = [1, 128], strides = [1, 1]} : vector<9x128xf32> to vector<1x128xf32>
    %31 = vector.broadcast %30 : vector<1x128xf32> to vector<4x128xf32>
    %32 = arith.mulf %29, %31 : vector<4x128xf32>
    %c7_i32 = arith.constant 7 : i32
    %33 = tpu.dynamic_rotate %24 by %c7_i32 dim 1 : vector<4x128xf32>, i32 -> vector<4x128xf32>
    %34 = vector.extract_strided_slice %0 {offsets = [2, 0], sizes = [1, 128], strides = [1, 1]} : vector<9x128xf32> to vector<1x128xf32>
    %35 = vector.broadcast %34 : vector<1x128xf32> to vector<4x128xf32>
    %36 = arith.mulf %33, %35 : vector<4x128xf32>
    %c1_i32 = arith.constant 1 : i32
    %37 = tpu.dynamic_rotate %24 by %c1_i32 dim 1 : vector<4x128xf32>, i32 -> vector<4x128xf32>
    %38 = vector.extract_strided_slice %0 {offsets = [3, 0], sizes = [1, 128], strides = [1, 1]} : vector<9x128xf32> to vector<1x128xf32>
    %39 = vector.broadcast %38 : vector<1x128xf32> to vector<4x128xf32>
    %40 = arith.mulf %37, %39 : vector<4x128xf32>
    %c127_i32 = arith.constant 127 : i32
    %41 = tpu.dynamic_rotate %24 by %c127_i32 dim 1 : vector<4x128xf32>, i32 -> vector<4x128xf32>
    %42 = vector.extract_strided_slice %0 {offsets = [5, 0], sizes = [1, 128], strides = [1, 1]} : vector<9x128xf32> to vector<1x128xf32>
    %43 = vector.broadcast %42 : vector<1x128xf32> to vector<4x128xf32>
    %44 = arith.mulf %41, %43 : vector<4x128xf32>
    %c121_i32 = arith.constant 121 : i32
    %45 = tpu.dynamic_rotate %24 by %c121_i32 dim 1 : vector<4x128xf32>, i32 -> vector<4x128xf32>
    %46 = vector.extract_strided_slice %0 {offsets = [6, 0], sizes = [1, 128], strides = [1, 1]} : vector<9x128xf32> to vector<1x128xf32>
    %47 = vector.broadcast %46 : vector<1x128xf32> to vector<4x128xf32>
    %48 = arith.mulf %45, %47 : vector<4x128xf32>
    %c120_i32 = arith.constant 120 : i32
    %49 = tpu.dynamic_rotate %24 by %c120_i32 dim 1 : vector<4x128xf32>, i32 -> vector<4x128xf32>
    %50 = vector.extract_strided_slice %0 {offsets = [7, 0], sizes = [1, 128], strides = [1, 1]} : vector<9x128xf32> to vector<1x128xf32>
    %51 = vector.broadcast %50 : vector<1x128xf32> to vector<4x128xf32>
    %52 = arith.mulf %49, %51 : vector<4x128xf32>
    %c119_i32 = arith.constant 119 : i32
    %53 = tpu.dynamic_rotate %24 by %c119_i32 dim 1 : vector<4x128xf32>, i32 -> vector<4x128xf32>
    %54 = vector.extract_strided_slice %0 {offsets = [8, 0], sizes = [1, 128], strides = [1, 1]} : vector<9x128xf32> to vector<1x128xf32>
    %55 = vector.broadcast %54 : vector<1x128xf32> to vector<4x128xf32>
    %56 = arith.mulf %53, %55 : vector<4x128xf32>
    %57 = tpu.concatenate %28, %32, %36, %40, %24, %44, %48, %52, %56 in 0 : vector<4x128xf32>, vector<4x128xf32>, vector<4x128xf32>, vector<4x128xf32>, vector<4x128xf32>, vector<4x128xf32>, vector<4x128xf32>, vector<4x128xf32>, vector<4x128xf32> -> vector<36x128xf32>
    %58 = arith.truncf %57 : vector<36x128xf32> to vector<36x128xbf16>
    %c0_12 = arith.constant 0 : index
    %c0_13 = arith.constant 0 : index
    %c0_14 = arith.constant 0 : index
    %59 = vector.load %arg1[%c0_12, %c0_13, %c0_14] : memref<12x8x128xbf16, #tpu.memory_space<vmem>>, vector<1x8x36xbf16>
    %60 = vector.shape_cast %59 : vector<1x8x36xbf16> to vector<8x36xbf16>
    %cst_15 = arith.constant dense<0.000000e+00> : vector<8x128xf32>
    %61 = tpu.matmul %60, %58, %cst_15 {dimension_numbers = #tpu.dot_dimension_numbers<[1], [0], [0], [1], [0, 0, 1, 1], [], []>} : vector<8x36xbf16>, vector<36x128xbf16>, vector<8x128xf32> -> vector<8x128xf32>
    %c8 = arith.constant 8 : index
    %c0_16 = arith.constant 0 : index
    %62 = vector.load %arg2[%c8, %c0_16] : memref<136x1xf32, #tpu.memory_space<vmem>>, vector<8x1xf32>
    %c8_17 = arith.constant 8 : index
    %c0_18 = arith.constant 0 : index
    %63 = vector.load %arg3[%c8_17, %c0_18] : memref<136x1xf32, #tpu.memory_space<vmem>>, vector<8x1xf32>
    %cst_19 = arith.constant dense<0.000000e+00> : vector<8xf32>
    %64 = vector.multi_reduction <add>, %61, %cst_19 [1] : vector<8x128xf32> to vector<8xf32>
    %65 = vector.shape_cast %64 : vector<8xf32> to vector<8x1xf32>
    %cst_20 = arith.constant 7.812500e-03 : f32
    %66 = vector.broadcast %cst_20 : f32 to vector<8x1xf32>
    %67 = arith.mulf %65, %66 : vector<8x1xf32>
    %68 = vector.broadcast %67 : vector<8x1xf32> to vector<8x128xf32>
    %69 = arith.subf %61, %68 : vector<8x128xf32>
    %70 = arith.mulf %69, %69 : vector<8x128xf32>
    %cst_21 = arith.constant dense<0.000000e+00> : vector<8xf32>
    %71 = vector.multi_reduction <add>, %70, %cst_21 [1] : vector<8x128xf32> to vector<8xf32>
    %72 = vector.shape_cast %71 : vector<8xf32> to vector<8x1xf32>
    %cst_22 = arith.constant 7.812500e-03 : f32
    %73 = vector.broadcast %cst_22 : f32 to vector<8x1xf32>
    %74 = arith.mulf %72, %73 : vector<8x1xf32>
    %cst_23 = arith.constant 9.99999974E-6 : f32
    %75 = vector.broadcast %cst_23 : f32 to vector<8x1xf32>
    %76 = arith.addf %74, %75 : vector<8x1xf32>
    %77 = math.rsqrt %76 : vector<8x1xf32>
    %78 = arith.mulf %77, %62 : vector<8x1xf32>
    %79 = vector.broadcast %78 : vector<8x1xf32> to vector<8x128xf32>
    %80 = arith.mulf %69, %79 : vector<8x128xf32>
    %81 = vector.broadcast %63 : vector<8x1xf32> to vector<8x128xf32>
    %82 = arith.addf %80, %81 : vector<8x128xf32>
    %cst_24 = arith.constant 0.000000e+00 : f32
    %83 = vector.broadcast %cst_24 : f32 to vector<8x128xf32>
    %84 = arith.maximumf %82, %83 : vector<8x128xf32>
    %c9_i32_25 = arith.constant 9 : i32
    %85 = tpu.dynamic_rotate %84 by %c9_i32_25 dim 1 : vector<8x128xf32>, i32 -> vector<8x128xf32>
    %86 = vector.extract_strided_slice %0 {offsets = [0, 0], sizes = [1, 128], strides = [1, 1]} : vector<9x128xf32> to vector<1x128xf32>
    %87 = vector.broadcast %86 : vector<1x128xf32> to vector<8x128xf32>
    %88 = arith.mulf %85, %87 : vector<8x128xf32>
    %c8_i32_26 = arith.constant 8 : i32
    %89 = tpu.dynamic_rotate %84 by %c8_i32_26 dim 1 : vector<8x128xf32>, i32 -> vector<8x128xf32>
    %90 = vector.extract_strided_slice %0 {offsets = [1, 0], sizes = [1, 128], strides = [1, 1]} : vector<9x128xf32> to vector<1x128xf32>
    %91 = vector.broadcast %90 : vector<1x128xf32> to vector<8x128xf32>
    %92 = arith.mulf %89, %91 : vector<8x128xf32>
    %c7_i32_27 = arith.constant 7 : i32
    %93 = tpu.dynamic_rotate %84 by %c7_i32_27 dim 1 : vector<8x128xf32>, i32 -> vector<8x128xf32>
    %94 = vector.extract_strided_slice %0 {offsets = [2, 0], sizes = [1, 128], strides = [1, 1]} : vector<9x128xf32> to vector<1x128xf32>
    %95 = vector.broadcast %94 : vector<1x128xf32> to vector<8x128xf32>
    %96 = arith.mulf %93, %95 : vector<8x128xf32>
    %c1_i32_28 = arith.constant 1 : i32
    %97 = tpu.dynamic_rotate %84 by %c1_i32_28 dim 1 : vector<8x128xf32>, i32 -> vector<8x128xf32>
    %98 = vector.extract_strided_slice %0 {offsets = [3, 0], sizes = [1, 128], strides = [1, 1]} : vector<9x128xf32> to vector<1x128xf32>
    %99 = vector.broadcast %98 : vector<1x128xf32> to vector<8x128xf32>
    %100 = arith.mulf %97, %99 : vector<8x128xf32>
    %c127_i32_29 = arith.constant 127 : i32
    %101 = tpu.dynamic_rotate %84 by %c127_i32_29 dim 1 : vector<8x128xf32>, i32 -> vector<8x128xf32>
    %102 = vector.extract_strided_slice %0 {offsets = [5, 0], sizes = [1, 128], strides = [1, 1]} : vector<9x128xf32> to vector<1x128xf32>
    %103 = vector.broadcast %102 : vector<1x128xf32> to vector<8x128xf32>
    %104 = arith.mulf %101, %103 : vector<8x128xf32>
    %c121_i32_30 = arith.constant 121 : i32
    %105 = tpu.dynamic_rotate %84 by %c121_i32_30 dim 1 : vector<8x128xf32>, i32 -> vector<8x128xf32>
    %106 = vector.extract_strided_slice %0 {offsets = [6, 0], sizes = [1, 128], strides = [1, 1]} : vector<9x128xf32> to vector<1x128xf32>
    %107 = vector.broadcast %106 : vector<1x128xf32> to vector<8x128xf32>
    %108 = arith.mulf %105, %107 : vector<8x128xf32>
    %c120_i32_31 = arith.constant 120 : i32
    %109 = tpu.dynamic_rotate %84 by %c120_i32_31 dim 1 : vector<8x128xf32>, i32 -> vector<8x128xf32>
    %110 = vector.extract_strided_slice %0 {offsets = [7, 0], sizes = [1, 128], strides = [1, 1]} : vector<9x128xf32> to vector<1x128xf32>
    %111 = vector.broadcast %110 : vector<1x128xf32> to vector<8x128xf32>
    %112 = arith.mulf %109, %111 : vector<8x128xf32>
    %c119_i32_32 = arith.constant 119 : i32
    %113 = tpu.dynamic_rotate %84 by %c119_i32_32 dim 1 : vector<8x128xf32>, i32 -> vector<8x128xf32>
    %114 = vector.extract_strided_slice %0 {offsets = [8, 0], sizes = [1, 128], strides = [1, 1]} : vector<9x128xf32> to vector<1x128xf32>
    %115 = vector.broadcast %114 : vector<1x128xf32> to vector<8x128xf32>
    %116 = arith.mulf %113, %115 : vector<8x128xf32>
    %117 = tpu.concatenate %88, %92, %96, %100, %84, %104, %108, %112, %116 in 0 : vector<8x128xf32>, vector<8x128xf32>, vector<8x128xf32>, vector<8x128xf32>, vector<8x128xf32>, vector<8x128xf32>, vector<8x128xf32>, vector<8x128xf32>, vector<8x128xf32> -> vector<72x128xf32>
    %118 = arith.truncf %117 : vector<72x128xf32> to vector<72x128xbf16>
    %c1 = arith.constant 1 : index
    %c0_33 = arith.constant 0 : index
    %c0_34 = arith.constant 0 : index
    %119 = vector.load %arg1[%c1, %c0_33, %c0_34] : memref<12x8x128xbf16, #tpu.memory_space<vmem>>, vector<1x8x72xbf16>
    %120 = vector.shape_cast %119 : vector<1x8x72xbf16> to vector<8x72xbf16>
    %cst_35 = arith.constant dense<0.000000e+00> : vector<8x128xf32>
    %121 = tpu.matmul %120, %118, %cst_35 {dimension_numbers = #tpu.dot_dimension_numbers<[1], [0], [0], [1], [0, 0, 1, 1], [], []>} : vector<8x72xbf16>, vector<72x128xbf16>, vector<8x128xf32> -> vector<8x128xf32>
    %c16 = arith.constant 16 : index
    %c0_36 = arith.constant 0 : index
    %122 = vector.load %arg2[%c16, %c0_36] : memref<136x1xf32, #tpu.memory_space<vmem>>, vector<8x1xf32>
    %c16_37 = arith.constant 16 : index
    %c0_38 = arith.constant 0 : index
    %123 = vector.load %arg3[%c16_37, %c0_38] : memref<136x1xf32, #tpu.memory_space<vmem>>, vector<8x1xf32>
    %cst_39 = arith.constant dense<0.000000e+00> : vector<8xf32>
    %124 = vector.multi_reduction <add>, %121, %cst_39 [1] : vector<8x128xf32> to vector<8xf32>
    %125 = vector.shape_cast %124 : vector<8xf32> to vector<8x1xf32>
    %cst_40 = arith.constant 7.812500e-03 : f32
    %126 = vector.broadcast %cst_40 : f32 to vector<8x1xf32>
    %127 = arith.mulf %125, %126 : vector<8x1xf32>
    %128 = vector.broadcast %127 : vector<8x1xf32> to vector<8x128xf32>
    %129 = arith.subf %121, %128 : vector<8x128xf32>
    %130 = arith.mulf %129, %129 : vector<8x128xf32>
    %cst_41 = arith.constant dense<0.000000e+00> : vector<8xf32>
    %131 = vector.multi_reduction <add>, %130, %cst_41 [1] : vector<8x128xf32> to vector<8xf32>
    %132 = vector.shape_cast %131 : vector<8xf32> to vector<8x1xf32>
    %cst_42 = arith.constant 7.812500e-03 : f32
    %133 = vector.broadcast %cst_42 : f32 to vector<8x1xf32>
    %134 = arith.mulf %132, %133 : vector<8x1xf32>
    %cst_43 = arith.constant 9.99999974E-6 : f32
    %135 = vector.broadcast %cst_43 : f32 to vector<8x1xf32>
    %136 = arith.addf %134, %135 : vector<8x1xf32>
    %137 = math.rsqrt %136 : vector<8x1xf32>
    %138 = arith.mulf %137, %122 : vector<8x1xf32>
    %139 = vector.broadcast %138 : vector<8x1xf32> to vector<8x128xf32>
    %140 = arith.mulf %129, %139 : vector<8x128xf32>
    %141 = vector.broadcast %123 : vector<8x1xf32> to vector<8x128xf32>
    %142 = arith.addf %140, %141 : vector<8x128xf32>
    %cst_44 = arith.constant 0.000000e+00 : f32
    %143 = vector.broadcast %cst_44 : f32 to vector<8x128xf32>
    %144 = arith.maximumf %142, %143 : vector<8x128xf32>
    %c9_i32_45 = arith.constant 9 : i32
    %145 = tpu.dynamic_rotate %144 by %c9_i32_45 dim 1 : vector<8x128xf32>, i32 -> vector<8x128xf32>
    %146 = vector.extract_strided_slice %0 {offsets = [0, 0], sizes = [1, 128], strides = [1, 1]} : vector<9x128xf32> to vector<1x128xf32>
    %147 = vector.broadcast %146 : vector<1x128xf32> to vector<8x128xf32>
    %148 = arith.mulf %145, %147 : vector<8x128xf32>
    %c8_i32_46 = arith.constant 8 : i32
    %149 = tpu.dynamic_rotate %144 by %c8_i32_46 dim 1 : vector<8x128xf32>, i32 -> vector<8x128xf32>
    %150 = vector.extract_strided_slice %0 {offsets = [1, 0], sizes = [1, 128], strides = [1, 1]} : vector<9x128xf32> to vector<1x128xf32>
    %151 = vector.broadcast %150 : vector<1x128xf32> to vector<8x128xf32>
    %152 = arith.mulf %149, %151 : vector<8x128xf32>
    %c7_i32_47 = arith.constant 7 : i32
    %153 = tpu.dynamic_rotate %144 by %c7_i32_47 dim 1 : vector<8x128xf32>, i32 -> vector<8x128xf32>
    %154 = vector.extract_strided_slice %0 {offsets = [2, 0], sizes = [1, 128], strides = [1, 1]} : vector<9x128xf32> to vector<1x128xf32>
    %155 = vector.broadcast %154 : vector<1x128xf32> to vector<8x128xf32>
    %156 = arith.mulf %153, %155 : vector<8x128xf32>
    %c1_i32_48 = arith.constant 1 : i32
    %157 = tpu.dynamic_rotate %144 by %c1_i32_48 dim 1 : vector<8x128xf32>, i32 -> vector<8x128xf32>
    %158 = vector.extract_strided_slice %0 {offsets = [3, 0], sizes = [1, 128], strides = [1, 1]} : vector<9x128xf32> to vector<1x128xf32>
    %159 = vector.broadcast %158 : vector<1x128xf32> to vector<8x128xf32>
    %160 = arith.mulf %157, %159 : vector<8x128xf32>
    %c127_i32_49 = arith.constant 127 : i32
    %161 = tpu.dynamic_rotate %144 by %c127_i32_49 dim 1 : vector<8x128xf32>, i32 -> vector<8x128xf32>
    %162 = vector.extract_strided_slice %0 {offsets = [5, 0], sizes = [1, 128], strides = [1, 1]} : vector<9x128xf32> to vector<1x128xf32>
    %163 = vector.broadcast %162 : vector<1x128xf32> to vector<8x128xf32>
    %164 = arith.mulf %161, %163 : vector<8x128xf32>
    %c121_i32_50 = arith.constant 121 : i32
    %165 = tpu.dynamic_rotate %144 by %c121_i32_50 dim 1 : vector<8x128xf32>, i32 -> vector<8x128xf32>
    %166 = vector.extract_strided_slice %0 {offsets = [6, 0], sizes = [1, 128], strides = [1, 1]} : vector<9x128xf32> to vector<1x128xf32>
    %167 = vector.broadcast %166 : vector<1x128xf32> to vector<8x128xf32>
    %168 = arith.mulf %165, %167 : vector<8x128xf32>
    %c120_i32_51 = arith.constant 120 : i32
    %169 = tpu.dynamic_rotate %144 by %c120_i32_51 dim 1 : vector<8x128xf32>, i32 -> vector<8x128xf32>
    %170 = vector.extract_strided_slice %0 {offsets = [7, 0], sizes = [1, 128], strides = [1, 1]} : vector<9x128xf32> to vector<1x128xf32>
    %171 = vector.broadcast %170 : vector<1x128xf32> to vector<8x128xf32>
    %172 = arith.mulf %169, %171 : vector<8x128xf32>
    %c119_i32_52 = arith.constant 119 : i32
    %173 = tpu.dynamic_rotate %144 by %c119_i32_52 dim 1 : vector<8x128xf32>, i32 -> vector<8x128xf32>
    %174 = vector.extract_strided_slice %0 {offsets = [8, 0], sizes = [1, 128], strides = [1, 1]} : vector<9x128xf32> to vector<1x128xf32>
    %175 = vector.broadcast %174 : vector<1x128xf32> to vector<8x128xf32>
    %176 = arith.mulf %173, %175 : vector<8x128xf32>
    %177 = tpu.concatenate %148, %152, %156, %160, %144, %164, %168, %172, %176 in 0 : vector<8x128xf32>, vector<8x128xf32>, vector<8x128xf32>, vector<8x128xf32>, vector<8x128xf32>, vector<8x128xf32>, vector<8x128xf32>, vector<8x128xf32>, vector<8x128xf32> -> vector<72x128xf32>
    %178 = arith.truncf %177 : vector<72x128xf32> to vector<72x128xbf16>
    %c2 = arith.constant 2 : index
    %c0_53 = arith.constant 0 : index
    %c0_54 = arith.constant 0 : index
    %179 = vector.load %arg1[%c2, %c0_53, %c0_54] : memref<12x8x128xbf16, #tpu.memory_space<vmem>>, vector<1x8x72xbf16>
    %180 = vector.shape_cast %179 : vector<1x8x72xbf16> to vector<8x72xbf16>
    %cst_55 = arith.constant dense<0.000000e+00> : vector<8x128xf32>
    %181 = tpu.matmul %180, %178, %cst_55 {dimension_numbers = #tpu.dot_dimension_numbers<[1], [0], [0], [1], [0, 0, 1, 1], [], []>} : vector<8x72xbf16>, vector<72x128xbf16>, vector<8x128xf32> -> vector<8x128xf32>
    %182 = arith.addf %181, %61 : vector<8x128xf32>
    %c24 = arith.constant 24 : index
    %c0_56 = arith.constant 0 : index
    %183 = vector.load %arg2[%c24, %c0_56] : memref<136x1xf32, #tpu.memory_space<vmem>>, vector<8x1xf32>
    %c24_57 = arith.constant 24 : index
    %c0_58 = arith.constant 0 : index
    %184 = vector.load %arg3[%c24_57, %c0_58] : memref<136x1xf32, #tpu.memory_space<vmem>>, vector<8x1xf32>
    %cst_59 = arith.constant dense<0.000000e+00> : vector<8xf32>
    %185 = vector.multi_reduction <add>, %182, %cst_59 [1] : vector<8x128xf32> to vector<8xf32>
    %186 = vector.shape_cast %185 : vector<8xf32> to vector<8x1xf32>
    %cst_60 = arith.constant 7.812500e-03 : f32
    %187 = vector.broadcast %cst_60 : f32 to vector<8x1xf32>
    %188 = arith.mulf %186, %187 : vector<8x1xf32>
    %189 = vector.broadcast %188 : vector<8x1xf32> to vector<8x128xf32>
    %190 = arith.subf %182, %189 : vector<8x128xf32>
    %191 = arith.mulf %190, %190 : vector<8x128xf32>
    %cst_61 = arith.constant dense<0.000000e+00> : vector<8xf32>
    %192 = vector.multi_reduction <add>, %191, %cst_61 [1] : vector<8x128xf32> to vector<8xf32>
    %193 = vector.shape_cast %192 : vector<8xf32> to vector<8x1xf32>
    %cst_62 = arith.constant 7.812500e-03 : f32
    %194 = vector.broadcast %cst_62 : f32 to vector<8x1xf32>
    %195 = arith.mulf %193, %194 : vector<8x1xf32>
    %cst_63 = arith.constant 9.99999974E-6 : f32
    %196 = vector.broadcast %cst_63 : f32 to vector<8x1xf32>
    %197 = arith.addf %195, %196 : vector<8x1xf32>
    %198 = math.rsqrt %197 : vector<8x1xf32>
    %199 = arith.mulf %198, %183 : vector<8x1xf32>
    %200 = vector.broadcast %199 : vector<8x1xf32> to vector<8x128xf32>
    %201 = arith.mulf %190, %200 : vector<8x128xf32>
    %202 = vector.broadcast %184 : vector<8x1xf32> to vector<8x128xf32>
    %203 = arith.addf %201, %202 : vector<8x128xf32>
    %cst_64 = arith.constant 0.000000e+00 : f32
    %204 = vector.broadcast %cst_64 : f32 to vector<8x128xf32>
    %205 = arith.maximumf %203, %204 : vector<8x128xf32>
    %c9_i32_65 = arith.constant 9 : i32
    %206 = tpu.dynamic_rotate %205 by %c9_i32_65 dim 1 : vector<8x128xf32>, i32 -> vector<8x128xf32>
    %207 = vector.extract_strided_slice %0 {offsets = [0, 0], sizes = [1, 128], strides = [1, 1]} : vector<9x128xf32> to vector<1x128xf32>
    %208 = vector.broadcast %207 : vector<1x128xf32> to vector<8x128xf32>
    %209 = arith.mulf %206, %208 : vector<8x128xf32>
    %c8_i32_66 = arith.constant 8 : i32
    %210 = tpu.dynamic_rotate %205 by %c8_i32_66 dim 1 : vector<8x128xf32>, i32 -> vector<8x128xf32>
    %211 = vector.extract_strided_slice %0 {offsets = [1, 0], sizes = [1, 128], strides = [1, 1]} : vector<9x128xf32> to vector<1x128xf32>
    %212 = vector.broadcast %211 : vector<1x128xf32> to vector<8x128xf32>
    %213 = arith.mulf %210, %212 : vector<8x128xf32>
    %c7_i32_67 = arith.constant 7 : i32
    %214 = tpu.dynamic_rotate %205 by %c7_i32_67 dim 1 : vector<8x128xf32>, i32 -> vector<8x128xf32>
    %215 = vector.extract_strided_slice %0 {offsets = [2, 0], sizes = [1, 128], strides = [1, 1]} : vector<9x128xf32> to vector<1x128xf32>
    %216 = vector.broadcast %215 : vector<1x128xf32> to vector<8x128xf32>
    %217 = arith.mulf %214, %216 : vector<8x128xf32>
    %c1_i32_68 = arith.constant 1 : i32
    %218 = tpu.dynamic_rotate %205 by %c1_i32_68 dim 1 : vector<8x128xf32>, i32 -> vector<8x128xf32>
    %219 = vector.extract_strided_slice %0 {offsets = [3, 0], sizes = [1, 128], strides = [1, 1]} : vector<9x128xf32> to vector<1x128xf32>
    %220 = vector.broadcast %219 : vector<1x128xf32> to vector<8x128xf32>
    %221 = arith.mulf %218, %220 : vector<8x128xf32>
    %c127_i32_69 = arith.constant 127 : i32
    %222 = tpu.dynamic_rotate %205 by %c127_i32_69 dim 1 : vector<8x128xf32>, i32 -> vector<8x128xf32>
    %223 = vector.extract_strided_slice %0 {offsets = [5, 0], sizes = [1, 128], strides = [1, 1]} : vector<9x128xf32> to vector<1x128xf32>
    %224 = vector.broadcast %223 : vector<1x128xf32> to vector<8x128xf32>
    %225 = arith.mulf %222, %224 : vector<8x128xf32>
    %c121_i32_70 = arith.constant 121 : i32
    %226 = tpu.dynamic_rotate %205 by %c121_i32_70 dim 1 : vector<8x128xf32>, i32 -> vector<8x128xf32>
    %227 = vector.extract_strided_slice %0 {offsets = [6, 0], sizes = [1, 128], strides = [1, 1]} : vector<9x128xf32> to vector<1x128xf32>
    %228 = vector.broadcast %227 : vector<1x128xf32> to vector<8x128xf32>
    %229 = arith.mulf %226, %228 : vector<8x128xf32>
    %c120_i32_71 = arith.constant 120 : i32
    %230 = tpu.dynamic_rotate %205 by %c120_i32_71 dim 1 : vector<8x128xf32>, i32 -> vector<8x128xf32>
    %231 = vector.extract_strided_slice %0 {offsets = [7, 0], sizes = [1, 128], strides = [1, 1]} : vector<9x128xf32> to vector<1x128xf32>
    %232 = vector.broadcast %231 : vector<1x128xf32> to vector<8x128xf32>
    %233 = arith.mulf %230, %232 : vector<8x128xf32>
    %c119_i32_72 = arith.constant 119 : i32
    %234 = tpu.dynamic_rotate %205 by %c119_i32_72 dim 1 : vector<8x128xf32>, i32 -> vector<8x128xf32>
    %235 = vector.extract_strided_slice %0 {offsets = [8, 0], sizes = [1, 128], strides = [1, 1]} : vector<9x128xf32> to vector<1x128xf32>
    %236 = vector.broadcast %235 : vector<1x128xf32> to vector<8x128xf32>
    %237 = arith.mulf %234, %236 : vector<8x128xf32>
    %238 = tpu.concatenate %209, %213, %217, %221, %205, %225, %229, %233, %237 in 0 : vector<8x128xf32>, vector<8x128xf32>, vector<8x128xf32>, vector<8x128xf32>, vector<8x128xf32>, vector<8x128xf32>, vector<8x128xf32>, vector<8x128xf32>, vector<8x128xf32> -> vector<72x128xf32>
    %239 = arith.truncf %238 : vector<72x128xf32> to vector<72x128xbf16>
    %c3 = arith.constant 3 : index
    %c0_73 = arith.constant 0 : index
    %c0_74 = arith.constant 0 : index
    %240 = vector.load %arg1[%c3, %c0_73, %c0_74] : memref<12x8x128xbf16, #tpu.memory_space<vmem>>, vector<1x8x72xbf16>
    %241 = vector.shape_cast %240 : vector<1x8x72xbf16> to vector<8x72xbf16>
    %cst_75 = arith.constant dense<0.000000e+00> : vector<8x128xf32>
    %242 = tpu.matmul %241, %239, %cst_75 {dimension_numbers = #tpu.dot_dimension_numbers<[1], [0], [0], [1], [0, 0, 1, 1], [], []>} : vector<8x72xbf16>, vector<72x128xbf16>, vector<8x128xf32> -> vector<8x128xf32>
    %c32 = arith.constant 32 : index
    %c0_76 = arith.constant 0 : index
    %243 = vector.load %arg2[%c32, %c0_76] : memref<136x1xf32, #tpu.memory_space<vmem>>, vector<8x1xf32>
    %c32_77 = arith.constant 32 : index
    %c0_78 = arith.constant 0 : index
    %244 = vector.load %arg3[%c32_77, %c0_78] : memref<136x1xf32, #tpu.memory_space<vmem>>, vector<8x1xf32>
    %cst_79 = arith.constant dense<0.000000e+00> : vector<8xf32>
    %245 = vector.multi_reduction <add>, %242, %cst_79 [1] : vector<8x128xf32> to vector<8xf32>
    %246 = vector.shape_cast %245 : vector<8xf32> to vector<8x1xf32>
    %cst_80 = arith.constant 7.812500e-03 : f32
    %247 = vector.broadcast %cst_80 : f32 to vector<8x1xf32>
    %248 = arith.mulf %246, %247 : vector<8x1xf32>
    %249 = vector.broadcast %248 : vector<8x1xf32> to vector<8x128xf32>
    %250 = arith.subf %242, %249 : vector<8x128xf32>
    %251 = arith.mulf %250, %250 : vector<8x128xf32>
    %cst_81 = arith.constant dense<0.000000e+00> : vector<8xf32>
    %252 = vector.multi_reduction <add>, %251, %cst_81 [1] : vector<8x128xf32> to vector<8xf32>
    %253 = vector.shape_cast %252 : vector<8xf32> to vector<8x1xf32>
    %cst_82 = arith.constant 7.812500e-03 : f32
    %254 = vector.broadcast %cst_82 : f32 to vector<8x1xf32>
    %255 = arith.mulf %253, %254 : vector<8x1xf32>
    %cst_83 = arith.constant 9.99999974E-6 : f32
    %256 = vector.broadcast %cst_83 : f32 to vector<8x1xf32>
    %257 = arith.addf %255, %256 : vector<8x1xf32>
    %258 = math.rsqrt %257 : vector<8x1xf32>
    %259 = arith.mulf %258, %243 : vector<8x1xf32>
    %260 = vector.broadcast %259 : vector<8x1xf32> to vector<8x128xf32>
    %261 = arith.mulf %250, %260 : vector<8x128xf32>
    %262 = vector.broadcast %244 : vector<8x1xf32> to vector<8x128xf32>
    %263 = arith.addf %261, %262 : vector<8x128xf32>
    %cst_84 = arith.constant 0.000000e+00 : f32
    %264 = vector.broadcast %cst_84 : f32 to vector<8x128xf32>
    %265 = arith.maximumf %263, %264 : vector<8x128xf32>
    %c9_i32_85 = arith.constant 9 : i32
    %266 = tpu.dynamic_rotate %265 by %c9_i32_85 dim 1 : vector<8x128xf32>, i32 -> vector<8x128xf32>
    %267 = vector.extract_strided_slice %0 {offsets = [0, 0], sizes = [1, 128], strides = [1, 1]} : vector<9x128xf32> to vector<1x128xf32>
    %268 = vector.broadcast %267 : vector<1x128xf32> to vector<8x128xf32>
    %269 = arith.mulf %266, %268 : vector<8x128xf32>
    %c8_i32_86 = arith.constant 8 : i32
    %270 = tpu.dynamic_rotate %265 by %c8_i32_86 dim 1 : vector<8x128xf32>, i32 -> vector<8x128xf32>
    %271 = vector.extract_strided_slice %0 {offsets = [1, 0], sizes = [1, 128], strides = [1, 1]} : vector<9x128xf32> to vector<1x128xf32>
    %272 = vector.broadcast %271 : vector<1x128xf32> to vector<8x128xf32>
    %273 = arith.mulf %270, %272 : vector<8x128xf32>
    %c7_i32_87 = arith.constant 7 : i32
    %274 = tpu.dynamic_rotate %265 by %c7_i32_87 dim 1 : vector<8x128xf32>, i32 -> vector<8x128xf32>
    %275 = vector.extract_strided_slice %0 {offsets = [2, 0], sizes = [1, 128], strides = [1, 1]} : vector<9x128xf32> to vector<1x128xf32>
    %276 = vector.broadcast %275 : vector<1x128xf32> to vector<8x128xf32>
    %277 = arith.mulf %274, %276 : vector<8x128xf32>
    %c1_i32_88 = arith.constant 1 : i32
    %278 = tpu.dynamic_rotate %265 by %c1_i32_88 dim 1 : vector<8x128xf32>, i32 -> vector<8x128xf32>
    %279 = vector.extract_strided_slice %0 {offsets = [3, 0], sizes = [1, 128], strides = [1, 1]} : vector<9x128xf32> to vector<1x128xf32>
    %280 = vector.broadcast %279 : vector<1x128xf32> to vector<8x128xf32>
    %281 = arith.mulf %278, %280 : vector<8x128xf32>
    %c127_i32_89 = arith.constant 127 : i32
    %282 = tpu.dynamic_rotate %265 by %c127_i32_89 dim 1 : vector<8x128xf32>, i32 -> vector<8x128xf32>
    %283 = vector.extract_strided_slice %0 {offsets = [5, 0], sizes = [1, 128], strides = [1, 1]} : vector<9x128xf32> to vector<1x128xf32>
    %284 = vector.broadcast %283 : vector<1x128xf32> to vector<8x128xf32>
    %285 = arith.mulf %282, %284 : vector<8x128xf32>
    %c121_i32_90 = arith.constant 121 : i32
    %286 = tpu.dynamic_rotate %265 by %c121_i32_90 dim 1 : vector<8x128xf32>, i32 -> vector<8x128xf32>
    %287 = vector.extract_strided_slice %0 {offsets = [6, 0], sizes = [1, 128], strides = [1, 1]} : vector<9x128xf32> to vector<1x128xf32>
    %288 = vector.broadcast %287 : vector<1x128xf32> to vector<8x128xf32>
    %289 = arith.mulf %286, %288 : vector<8x128xf32>
    %c120_i32_91 = arith.constant 120 : i32
    %290 = tpu.dynamic_rotate %265 by %c120_i32_91 dim 1 : vector<8x128xf32>, i32 -> vector<8x128xf32>
    %291 = vector.extract_strided_slice %0 {offsets = [7, 0], sizes = [1, 128], strides = [1, 1]} : vector<9x128xf32> to vector<1x128xf32>
    %292 = vector.broadcast %291 : vector<1x128xf32> to vector<8x128xf32>
    %293 = arith.mulf %290, %292 : vector<8x128xf32>
    %c119_i32_92 = arith.constant 119 : i32
    %294 = tpu.dynamic_rotate %265 by %c119_i32_92 dim 1 : vector<8x128xf32>, i32 -> vector<8x128xf32>
    %295 = vector.extract_strided_slice %0 {offsets = [8, 0], sizes = [1, 128], strides = [1, 1]} : vector<9x128xf32> to vector<1x128xf32>
    %296 = vector.broadcast %295 : vector<1x128xf32> to vector<8x128xf32>
    %297 = arith.mulf %294, %296 : vector<8x128xf32>
    %298 = tpu.concatenate %269, %273, %277, %281, %265, %285, %289, %293, %297 in 0 : vector<8x128xf32>, vector<8x128xf32>, vector<8x128xf32>, vector<8x128xf32>, vector<8x128xf32>, vector<8x128xf32>, vector<8x128xf32>, vector<8x128xf32>, vector<8x128xf32> -> vector<72x128xf32>
    %299 = arith.truncf %298 : vector<72x128xf32> to vector<72x128xbf16>
    %c4 = arith.constant 4 : index
    %c0_93 = arith.constant 0 : index
    %c0_94 = arith.constant 0 : index
    %300 = vector.load %arg1[%c4, %c0_93, %c0_94] : memref<12x8x128xbf16, #tpu.memory_space<vmem>>, vector<1x8x72xbf16>
    %301 = vector.shape_cast %300 : vector<1x8x72xbf16> to vector<8x72xbf16>
    %cst_95 = arith.constant dense<0.000000e+00> : vector<8x128xf32>
    %302 = tpu.matmul %301, %299, %cst_95 {dimension_numbers = #tpu.dot_dimension_numbers<[1], [0], [0], [1], [0, 0, 1, 1], [], []>} : vector<8x72xbf16>, vector<72x128xbf16>, vector<8x128xf32> -> vector<8x128xf32>
    %303 = arith.addf %302, %182 : vector<8x128xf32>
    %304 = tpu.concatenate %182, %303, %61 in 0 : vector<8x128xf32>, vector<8x128xf32>, vector<8x128xf32> -> vector<24x128xf32>
    %c40 = arith.constant 40 : index
    %c0_96 = arith.constant 0 : index
    %305 = vector.load %arg2[%c40, %c0_96] : memref<136x1xf32, #tpu.memory_space<vmem>>, vector<24x1xf32>
    %c40_97 = arith.constant 40 : index
    %c0_98 = arith.constant 0 : index
    %306 = vector.load %arg3[%c40_97, %c0_98] : memref<136x1xf32, #tpu.memory_space<vmem>>, vector<24x1xf32>
    %cst_99 = arith.constant dense<0.000000e+00> : vector<24xf32>
    %307 = vector.multi_reduction <add>, %304, %cst_99 [1] : vector<24x128xf32> to vector<24xf32>
    %308 = vector.shape_cast %307 : vector<24xf32> to vector<24x1xf32>
    %cst_100 = arith.constant 7.812500e-03 : f32
    %309 = vector.broadcast %cst_100 : f32 to vector<24x1xf32>
    %310 = arith.mulf %308, %309 : vector<24x1xf32>
    %311 = vector.broadcast %310 : vector<24x1xf32> to vector<24x128xf32>
    %312 = arith.subf %304, %311 : vector<24x128xf32>
    %313 = arith.mulf %312, %312 : vector<24x128xf32>
    %cst_101 = arith.constant dense<0.000000e+00> : vector<24xf32>
    %314 = vector.multi_reduction <add>, %313, %cst_101 [1] : vector<24x128xf32> to vector<24xf32>
    %315 = vector.shape_cast %314 : vector<24xf32> to vector<24x1xf32>
    %cst_102 = arith.constant 7.812500e-03 : f32
    %316 = vector.broadcast %cst_102 : f32 to vector<24x1xf32>
    %317 = arith.mulf %315, %316 : vector<24x1xf32>
    %cst_103 = arith.constant 9.99999974E-6 : f32
    %318 = vector.broadcast %cst_103 : f32 to vector<24x1xf32>
    %319 = arith.addf %317, %318 : vector<24x1xf32>
    %320 = math.rsqrt %319 : vector<24x1xf32>
    %321 = arith.mulf %320, %305 : vector<24x1xf32>
    %322 = vector.broadcast %321 : vector<24x1xf32> to vector<24x128xf32>
    %323 = arith.mulf %312, %322 : vector<24x128xf32>
    %324 = vector.broadcast %306 : vector<24x1xf32> to vector<24x128xf32>
    %325 = arith.addf %323, %324 : vector<24x128xf32>
    %cst_104 = arith.constant 0.000000e+00 : f32
    %326 = vector.broadcast %cst_104 : f32 to vector<24x128xf32>
    %327 = arith.maximumf %325, %326 : vector<24x128xf32>
    %c5 = arith.constant 5 : index
    %c0_105 = arith.constant 0 : index
    %c0_106 = arith.constant 0 : index
    %328 = vector.load %arg1[%c5, %c0_105, %c0_106] : memref<12x8x128xbf16, #tpu.memory_space<vmem>>, vector<1x8x24xbf16>
    %329 = vector.shape_cast %328 : vector<1x8x24xbf16> to vector<8x24xbf16>
    %330 = arith.truncf %327 : vector<24x128xf32> to vector<24x128xbf16>
    %cst_107 = arith.constant dense<0.000000e+00> : vector<8x128xf32>
    %331 = tpu.matmul %329, %330, %cst_107 {dimension_numbers = #tpu.dot_dimension_numbers<[1], [0], [0], [1], [0, 0, 1, 1], [], []>} : vector<8x24xbf16>, vector<24x128xbf16>, vector<8x128xf32> -> vector<8x128xf32>
    %c64 = arith.constant 64 : index
    %c0_108 = arith.constant 0 : index
    %332 = vector.load %arg2[%c64, %c0_108] : memref<136x1xf32, #tpu.memory_space<vmem>>, vector<8x1xf32>
    %c64_109 = arith.constant 64 : index
    %c0_110 = arith.constant 0 : index
    %333 = vector.load %arg3[%c64_109, %c0_110] : memref<136x1xf32, #tpu.memory_space<vmem>>, vector<8x1xf32>
    %cst_111 = arith.constant dense<0.000000e+00> : vector<8xf32>
    %334 = vector.multi_reduction <add>, %331, %cst_111 [1] : vector<8x128xf32> to vector<8xf32>
    %335 = vector.shape_cast %334 : vector<8xf32> to vector<8x1xf32>
    %cst_112 = arith.constant 7.812500e-03 : f32
    %336 = vector.broadcast %cst_112 : f32 to vector<8x1xf32>
    %337 = arith.mulf %335, %336 : vector<8x1xf32>
    %338 = vector.broadcast %337 : vector<8x1xf32> to vector<8x128xf32>
    %339 = arith.subf %331, %338 : vector<8x128xf32>
    %340 = arith.mulf %339, %339 : vector<8x128xf32>
    %cst_113 = arith.constant dense<0.000000e+00> : vector<8xf32>
    %341 = vector.multi_reduction <add>, %340, %cst_113 [1] : vector<8x128xf32> to vector<8xf32>
    %342 = vector.shape_cast %341 : vector<8xf32> to vector<8x1xf32>
    %cst_114 = arith.constant 7.812500e-03 : f32
    %343 = vector.broadcast %cst_114 : f32 to vector<8x1xf32>
    %344 = arith.mulf %342, %343 : vector<8x1xf32>
    %cst_115 = arith.constant 9.99999974E-6 : f32
    %345 = vector.broadcast %cst_115 : f32 to vector<8x1xf32>
    %346 = arith.addf %344, %345 : vector<8x1xf32>
    %347 = math.rsqrt %346 : vector<8x1xf32>
    %348 = arith.mulf %347, %332 : vector<8x1xf32>
    %349 = vector.broadcast %348 : vector<8x1xf32> to vector<8x128xf32>
    %350 = arith.mulf %339, %349 : vector<8x128xf32>
    %351 = vector.broadcast %333 : vector<8x1xf32> to vector<8x128xf32>
    %352 = arith.addf %350, %351 : vector<8x128xf32>
    %cst_116 = arith.constant 0.000000e+00 : f32
    %353 = vector.broadcast %cst_116 : f32 to vector<8x128xf32>
    %354 = arith.maximumf %352, %353 : vector<8x128xf32>
    %c9_i32_117 = arith.constant 9 : i32
    %355 = tpu.dynamic_rotate %354 by %c9_i32_117 dim 1 : vector<8x128xf32>, i32 -> vector<8x128xf32>
    %356 = vector.extract_strided_slice %0 {offsets = [0, 0], sizes = [1, 128], strides = [1, 1]} : vector<9x128xf32> to vector<1x128xf32>
    %357 = vector.broadcast %356 : vector<1x128xf32> to vector<8x128xf32>
    %358 = arith.mulf %355, %357 : vector<8x128xf32>
    %c8_i32_118 = arith.constant 8 : i32
    %359 = tpu.dynamic_rotate %354 by %c8_i32_118 dim 1 : vector<8x128xf32>, i32 -> vector<8x128xf32>
    %360 = vector.extract_strided_slice %0 {offsets = [1, 0], sizes = [1, 128], strides = [1, 1]} : vector<9x128xf32> to vector<1x128xf32>
    %361 = vector.broadcast %360 : vector<1x128xf32> to vector<8x128xf32>
    %362 = arith.mulf %359, %361 : vector<8x128xf32>
    %c7_i32_119 = arith.constant 7 : i32
    %363 = tpu.dynamic_rotate %354 by %c7_i32_119 dim 1 : vector<8x128xf32>, i32 -> vector<8x128xf32>
    %364 = vector.extract_strided_slice %0 {offsets = [2, 0], sizes = [1, 128], strides = [1, 1]} : vector<9x128xf32> to vector<1x128xf32>
    %365 = vector.broadcast %364 : vector<1x128xf32> to vector<8x128xf32>
    %366 = arith.mulf %363, %365 : vector<8x128xf32>
    %c1_i32_120 = arith.constant 1 : i32
    %367 = tpu.dynamic_rotate %354 by %c1_i32_120 dim 1 : vector<8x128xf32>, i32 -> vector<8x128xf32>
    %368 = vector.extract_strided_slice %0 {offsets = [3, 0], sizes = [1, 128], strides = [1, 1]} : vector<9x128xf32> to vector<1x128xf32>
    %369 = vector.broadcast %368 : vector<1x128xf32> to vector<8x128xf32>
    %370 = arith.mulf %367, %369 : vector<8x128xf32>
    %c127_i32_121 = arith.constant 127 : i32
    %371 = tpu.dynamic_rotate %354 by %c127_i32_121 dim 1 : vector<8x128xf32>, i32 -> vector<8x128xf32>
    %372 = vector.extract_strided_slice %0 {offsets = [5, 0], sizes = [1, 128], strides = [1, 1]} : vector<9x128xf32> to vector<1x128xf32>
    %373 = vector.broadcast %372 : vector<1x128xf32> to vector<8x128xf32>
    %374 = arith.mulf %371, %373 : vector<8x128xf32>
    %c121_i32_122 = arith.constant 121 : i32
    %375 = tpu.dynamic_rotate %354 by %c121_i32_122 dim 1 : vector<8x128xf32>, i32 -> vector<8x128xf32>
    %376 = vector.extract_strided_slice %0 {offsets = [6, 0], sizes = [1, 128], strides = [1, 1]} : vector<9x128xf32> to vector<1x128xf32>
    %377 = vector.broadcast %376 : vector<1x128xf32> to vector<8x128xf32>
    %378 = arith.mulf %375, %377 : vector<8x128xf32>
    %c120_i32_123 = arith.constant 120 : i32
    %379 = tpu.dynamic_rotate %354 by %c120_i32_123 dim 1 : vector<8x128xf32>, i32 -> vector<8x128xf32>
    %380 = vector.extract_strided_slice %0 {offsets = [7, 0], sizes = [1, 128], strides = [1, 1]} : vector<9x128xf32> to vector<1x128xf32>
    %381 = vector.broadcast %380 : vector<1x128xf32> to vector<8x128xf32>
    %382 = arith.mulf %379, %381 : vector<8x128xf32>
    %c119_i32_124 = arith.constant 119 : i32
    %383 = tpu.dynamic_rotate %354 by %c119_i32_124 dim 1 : vector<8x128xf32>, i32 -> vector<8x128xf32>
    %384 = vector.extract_strided_slice %0 {offsets = [8, 0], sizes = [1, 128], strides = [1, 1]} : vector<9x128xf32> to vector<1x128xf32>
    %385 = vector.broadcast %384 : vector<1x128xf32> to vector<8x128xf32>
    %386 = arith.mulf %383, %385 : vector<8x128xf32>
    %387 = tpu.concatenate %358, %362, %366, %370, %354, %374, %378, %382, %386 in 0 : vector<8x128xf32>, vector<8x128xf32>, vector<8x128xf32>, vector<8x128xf32>, vector<8x128xf32>, vector<8x128xf32>, vector<8x128xf32>, vector<8x128xf32>, vector<8x128xf32> -> vector<72x128xf32>
    %388 = arith.truncf %387 : vector<72x128xf32> to vector<72x128xbf16>
    %c6 = arith.constant 6 : index
    %c0_125 = arith.constant 0 : index
    %c0_126 = arith.constant 0 : index
    %389 = vector.load %arg1[%c6, %c0_125, %c0_126] : memref<12x8x128xbf16, #tpu.memory_space<vmem>>, vector<1x8x72xbf16>
    %390 = vector.shape_cast %389 : vector<1x8x72xbf16> to vector<8x72xbf16>
    %cst_127 = arith.constant dense<0.000000e+00> : vector<8x128xf32>
    %391 = tpu.matmul %390, %388, %cst_127 {dimension_numbers = #tpu.dot_dimension_numbers<[1], [0], [0], [1], [0, 0, 1, 1], [], []>} : vector<8x72xbf16>, vector<72x128xbf16>, vector<8x128xf32> -> vector<8x128xf32>
    %c72 = arith.constant 72 : index
    %c0_128 = arith.constant 0 : index
    %392 = vector.load %arg2[%c72, %c0_128] : memref<136x1xf32, #tpu.memory_space<vmem>>, vector<8x1xf32>
    %c72_129 = arith.constant 72 : index
    %c0_130 = arith.constant 0 : index
    %393 = vector.load %arg3[%c72_129, %c0_130] : memref<136x1xf32, #tpu.memory_space<vmem>>, vector<8x1xf32>
    %cst_131 = arith.constant dense<0.000000e+00> : vector<8xf32>
    %394 = vector.multi_reduction <add>, %391, %cst_131 [1] : vector<8x128xf32> to vector<8xf32>
    %395 = vector.shape_cast %394 : vector<8xf32> to vector<8x1xf32>
    %cst_132 = arith.constant 7.812500e-03 : f32
    %396 = vector.broadcast %cst_132 : f32 to vector<8x1xf32>
    %397 = arith.mulf %395, %396 : vector<8x1xf32>
    %398 = vector.broadcast %397 : vector<8x1xf32> to vector<8x128xf32>
    %399 = arith.subf %391, %398 : vector<8x128xf32>
    %400 = arith.mulf %399, %399 : vector<8x128xf32>
    %cst_133 = arith.constant dense<0.000000e+00> : vector<8xf32>
    %401 = vector.multi_reduction <add>, %400, %cst_133 [1] : vector<8x128xf32> to vector<8xf32>
    %402 = vector.shape_cast %401 : vector<8xf32> to vector<8x1xf32>
    %cst_134 = arith.constant 7.812500e-03 : f32
    %403 = vector.broadcast %cst_134 : f32 to vector<8x1xf32>
    %404 = arith.mulf %402, %403 : vector<8x1xf32>
    %cst_135 = arith.constant 9.99999974E-6 : f32
    %405 = vector.broadcast %cst_135 : f32 to vector<8x1xf32>
    %406 = arith.addf %404, %405 : vector<8x1xf32>
    %407 = math.rsqrt %406 : vector<8x1xf32>
    %408 = arith.mulf %407, %392 : vector<8x1xf32>
    %409 = vector.broadcast %408 : vector<8x1xf32> to vector<8x128xf32>
    %410 = arith.mulf %399, %409 : vector<8x128xf32>
    %411 = vector.broadcast %393 : vector<8x1xf32> to vector<8x128xf32>
    %412 = arith.addf %410, %411 : vector<8x128xf32>
    %cst_136 = arith.constant 0.000000e+00 : f32
    %413 = vector.broadcast %cst_136 : f32 to vector<8x128xf32>
    %414 = arith.maximumf %412, %413 : vector<8x128xf32>
    %c9_i32_137 = arith.constant 9 : i32
    %415 = tpu.dynamic_rotate %414 by %c9_i32_137 dim 1 : vector<8x128xf32>, i32 -> vector<8x128xf32>
    %416 = vector.extract_strided_slice %0 {offsets = [0, 0], sizes = [1, 128], strides = [1, 1]} : vector<9x128xf32> to vector<1x128xf32>
    %417 = vector.broadcast %416 : vector<1x128xf32> to vector<8x128xf32>
    %418 = arith.mulf %415, %417 : vector<8x128xf32>
    %c8_i32_138 = arith.constant 8 : i32
    %419 = tpu.dynamic_rotate %414 by %c8_i32_138 dim 1 : vector<8x128xf32>, i32 -> vector<8x128xf32>
    %420 = vector.extract_strided_slice %0 {offsets = [1, 0], sizes = [1, 128], strides = [1, 1]} : vector<9x128xf32> to vector<1x128xf32>
    %421 = vector.broadcast %420 : vector<1x128xf32> to vector<8x128xf32>
    %422 = arith.mulf %419, %421 : vector<8x128xf32>
    %c7_i32_139 = arith.constant 7 : i32
    %423 = tpu.dynamic_rotate %414 by %c7_i32_139 dim 1 : vector<8x128xf32>, i32 -> vector<8x128xf32>
    %424 = vector.extract_strided_slice %0 {offsets = [2, 0], sizes = [1, 128], strides = [1, 1]} : vector<9x128xf32> to vector<1x128xf32>
    %425 = vector.broadcast %424 : vector<1x128xf32> to vector<8x128xf32>
    %426 = arith.mulf %423, %425 : vector<8x128xf32>
    %c1_i32_140 = arith.constant 1 : i32
    %427 = tpu.dynamic_rotate %414 by %c1_i32_140 dim 1 : vector<8x128xf32>, i32 -> vector<8x128xf32>
    %428 = vector.extract_strided_slice %0 {offsets = [3, 0], sizes = [1, 128], strides = [1, 1]} : vector<9x128xf32> to vector<1x128xf32>
    %429 = vector.broadcast %428 : vector<1x128xf32> to vector<8x128xf32>
    %430 = arith.mulf %427, %429 : vector<8x128xf32>
    %c127_i32_141 = arith.constant 127 : i32
    %431 = tpu.dynamic_rotate %414 by %c127_i32_141 dim 1 : vector<8x128xf32>, i32 -> vector<8x128xf32>
    %432 = vector.extract_strided_slice %0 {offsets = [5, 0], sizes = [1, 128], strides = [1, 1]} : vector<9x128xf32> to vector<1x128xf32>
    %433 = vector.broadcast %432 : vector<1x128xf32> to vector<8x128xf32>
    %434 = arith.mulf %431, %433 : vector<8x128xf32>
    %c121_i32_142 = arith.constant 121 : i32
    %435 = tpu.dynamic_rotate %414 by %c121_i32_142 dim 1 : vector<8x128xf32>, i32 -> vector<8x128xf32>
    %436 = vector.extract_strided_slice %0 {offsets = [6, 0], sizes = [1, 128], strides = [1, 1]} : vector<9x128xf32> to vector<1x128xf32>
    %437 = vector.broadcast %436 : vector<1x128xf32> to vector<8x128xf32>
    %438 = arith.mulf %435, %437 : vector<8x128xf32>
    %c120_i32_143 = arith.constant 120 : i32
    %439 = tpu.dynamic_rotate %414 by %c120_i32_143 dim 1 : vector<8x128xf32>, i32 -> vector<8x128xf32>
    %440 = vector.extract_strided_slice %0 {offsets = [7, 0], sizes = [1, 128], strides = [1, 1]} : vector<9x128xf32> to vector<1x128xf32>
    %441 = vector.broadcast %440 : vector<1x128xf32> to vector<8x128xf32>
    %442 = arith.mulf %439, %441 : vector<8x128xf32>
    %c119_i32_144 = arith.constant 119 : i32
    %443 = tpu.dynamic_rotate %414 by %c119_i32_144 dim 1 : vector<8x128xf32>, i32 -> vector<8x128xf32>
    %444 = vector.extract_strided_slice %0 {offsets = [8, 0], sizes = [1, 128], strides = [1, 1]} : vector<9x128xf32> to vector<1x128xf32>
    %445 = vector.broadcast %444 : vector<1x128xf32> to vector<8x128xf32>
    %446 = arith.mulf %443, %445 : vector<8x128xf32>
    %447 = tpu.concatenate %418, %422, %426, %430, %414, %434, %438, %442, %446 in 0 : vector<8x128xf32>, vector<8x128xf32>, vector<8x128xf32>, vector<8x128xf32>, vector<8x128xf32>, vector<8x128xf32>, vector<8x128xf32>, vector<8x128xf32>, vector<8x128xf32> -> vector<72x128xf32>
    %448 = arith.truncf %447 : vector<72x128xf32> to vector<72x128xbf16>
    %c7 = arith.constant 7 : index
    %c0_145 = arith.constant 0 : index
    %c0_146 = arith.constant 0 : index
    %449 = vector.load %arg1[%c7, %c0_145, %c0_146] : memref<12x8x128xbf16, #tpu.memory_space<vmem>>, vector<1x8x72xbf16>
    %450 = vector.shape_cast %449 : vector<1x8x72xbf16> to vector<8x72xbf16>
    %cst_147 = arith.constant dense<0.000000e+00> : vector<8x128xf32>
    %451 = tpu.matmul %450, %448, %cst_147 {dimension_numbers = #tpu.dot_dimension_numbers<[1], [0], [0], [1], [0, 0, 1, 1], [], []>} : vector<8x72xbf16>, vector<72x128xbf16>, vector<8x128xf32> -> vector<8x128xf32>
    %452 = arith.addf %451, %331 : vector<8x128xf32>
    %c80 = arith.constant 80 : index
    %c0_148 = arith.constant 0 : index
    %453 = vector.load %arg2[%c80, %c0_148] : memref<136x1xf32, #tpu.memory_space<vmem>>, vector<8x1xf32>
    %c80_149 = arith.constant 80 : index
    %c0_150 = arith.constant 0 : index
    %454 = vector.load %arg3[%c80_149, %c0_150] : memref<136x1xf32, #tpu.memory_space<vmem>>, vector<8x1xf32>
    %cst_151 = arith.constant dense<0.000000e+00> : vector<8xf32>
    %455 = vector.multi_reduction <add>, %452, %cst_151 [1] : vector<8x128xf32> to vector<8xf32>
    %456 = vector.shape_cast %455 : vector<8xf32> to vector<8x1xf32>
    %cst_152 = arith.constant 7.812500e-03 : f32
    %457 = vector.broadcast %cst_152 : f32 to vector<8x1xf32>
    %458 = arith.mulf %456, %457 : vector<8x1xf32>
    %459 = vector.broadcast %458 : vector<8x1xf32> to vector<8x128xf32>
    %460 = arith.subf %452, %459 : vector<8x128xf32>
    %461 = arith.mulf %460, %460 : vector<8x128xf32>
    %cst_153 = arith.constant dense<0.000000e+00> : vector<8xf32>
    %462 = vector.multi_reduction <add>, %461, %cst_153 [1] : vector<8x128xf32> to vector<8xf32>
    %463 = vector.shape_cast %462 : vector<8xf32> to vector<8x1xf32>
    %cst_154 = arith.constant 7.812500e-03 : f32
    %464 = vector.broadcast %cst_154 : f32 to vector<8x1xf32>
    %465 = arith.mulf %463, %464 : vector<8x1xf32>
    %cst_155 = arith.constant 9.99999974E-6 : f32
    %466 = vector.broadcast %cst_155 : f32 to vector<8x1xf32>
    %467 = arith.addf %465, %466 : vector<8x1xf32>
    %468 = math.rsqrt %467 : vector<8x1xf32>
    %469 = arith.mulf %468, %453 : vector<8x1xf32>
    %470 = vector.broadcast %469 : vector<8x1xf32> to vector<8x128xf32>
    %471 = arith.mulf %460, %470 : vector<8x128xf32>
    %472 = vector.broadcast %454 : vector<8x1xf32> to vector<8x128xf32>
    %473 = arith.addf %471, %472 : vector<8x128xf32>
    %cst_156 = arith.constant 0.000000e+00 : f32
    %474 = vector.broadcast %cst_156 : f32 to vector<8x128xf32>
    %475 = arith.maximumf %473, %474 : vector<8x128xf32>
    %c9_i32_157 = arith.constant 9 : i32
    %476 = tpu.dynamic_rotate %475 by %c9_i32_157 dim 1 : vector<8x128xf32>, i32 -> vector<8x128xf32>
    %477 = vector.extract_strided_slice %0 {offsets = [0, 0], sizes = [1, 128], strides = [1, 1]} : vector<9x128xf32> to vector<1x128xf32>
    %478 = vector.broadcast %477 : vector<1x128xf32> to vector<8x128xf32>
    %479 = arith.mulf %476, %478 : vector<8x128xf32>
    %c8_i32_158 = arith.constant 8 : i32
    %480 = tpu.dynamic_rotate %475 by %c8_i32_158 dim 1 : vector<8x128xf32>, i32 -> vector<8x128xf32>
    %481 = vector.extract_strided_slice %0 {offsets = [1, 0], sizes = [1, 128], strides = [1, 1]} : vector<9x128xf32> to vector<1x128xf32>
    %482 = vector.broadcast %481 : vector<1x128xf32> to vector<8x128xf32>
    %483 = arith.mulf %480, %482 : vector<8x128xf32>
    %c7_i32_159 = arith.constant 7 : i32
    %484 = tpu.dynamic_rotate %475 by %c7_i32_159 dim 1 : vector<8x128xf32>, i32 -> vector<8x128xf32>
    %485 = vector.extract_strided_slice %0 {offsets = [2, 0], sizes = [1, 128], strides = [1, 1]} : vector<9x128xf32> to vector<1x128xf32>
    %486 = vector.broadcast %485 : vector<1x128xf32> to vector<8x128xf32>
    %487 = arith.mulf %484, %486 : vector<8x128xf32>
    %c1_i32_160 = arith.constant 1 : i32
    %488 = tpu.dynamic_rotate %475 by %c1_i32_160 dim 1 : vector<8x128xf32>, i32 -> vector<8x128xf32>
    %489 = vector.extract_strided_slice %0 {offsets = [3, 0], sizes = [1, 128], strides = [1, 1]} : vector<9x128xf32> to vector<1x128xf32>
    %490 = vector.broadcast %489 : vector<1x128xf32> to vector<8x128xf32>
    %491 = arith.mulf %488, %490 : vector<8x128xf32>
    %c127_i32_161 = arith.constant 127 : i32
    %492 = tpu.dynamic_rotate %475 by %c127_i32_161 dim 1 : vector<8x128xf32>, i32 -> vector<8x128xf32>
    %493 = vector.extract_strided_slice %0 {offsets = [5, 0], sizes = [1, 128], strides = [1, 1]} : vector<9x128xf32> to vector<1x128xf32>
    %494 = vector.broadcast %493 : vector<1x128xf32> to vector<8x128xf32>
    %495 = arith.mulf %492, %494 : vector<8x128xf32>
    %c121_i32_162 = arith.constant 121 : i32
    %496 = tpu.dynamic_rotate %475 by %c121_i32_162 dim 1 : vector<8x128xf32>, i32 -> vector<8x128xf32>
    %497 = vector.extract_strided_slice %0 {offsets = [6, 0], sizes = [1, 128], strides = [1, 1]} : vector<9x128xf32> to vector<1x128xf32>
    %498 = vector.broadcast %497 : vector<1x128xf32> to vector<8x128xf32>
    %499 = arith.mulf %496, %498 : vector<8x128xf32>
    %c120_i32_163 = arith.constant 120 : i32
    %500 = tpu.dynamic_rotate %475 by %c120_i32_163 dim 1 : vector<8x128xf32>, i32 -> vector<8x128xf32>
    %501 = vector.extract_strided_slice %0 {offsets = [7, 0], sizes = [1, 128], strides = [1, 1]} : vector<9x128xf32> to vector<1x128xf32>
    %502 = vector.broadcast %501 : vector<1x128xf32> to vector<8x128xf32>
    %503 = arith.mulf %500, %502 : vector<8x128xf32>
    %c119_i32_164 = arith.constant 119 : i32
    %504 = tpu.dynamic_rotate %475 by %c119_i32_164 dim 1 : vector<8x128xf32>, i32 -> vector<8x128xf32>
    %505 = vector.extract_strided_slice %0 {offsets = [8, 0], sizes = [1, 128], strides = [1, 1]} : vector<9x128xf32> to vector<1x128xf32>
    %506 = vector.broadcast %505 : vector<1x128xf32> to vector<8x128xf32>
    %507 = arith.mulf %504, %506 : vector<8x128xf32>
    %508 = tpu.concatenate %479, %483, %487, %491, %475, %495, %499, %503, %507 in 0 : vector<8x128xf32>, vector<8x128xf32>, vector<8x128xf32>, vector<8x128xf32>, vector<8x128xf32>, vector<8x128xf32>, vector<8x128xf32>, vector<8x128xf32>, vector<8x128xf32> -> vector<72x128xf32>
    %509 = arith.truncf %508 : vector<72x128xf32> to vector<72x128xbf16>
    %c8_165 = arith.constant 8 : index
    %c0_166 = arith.constant 0 : index
    %c0_167 = arith.constant 0 : index
    %510 = vector.load %arg1[%c8_165, %c0_166, %c0_167] : memref<12x8x128xbf16, #tpu.memory_space<vmem>>, vector<1x8x72xbf16>
    %511 = vector.shape_cast %510 : vector<1x8x72xbf16> to vector<8x72xbf16>
    %cst_168 = arith.constant dense<0.000000e+00> : vector<8x128xf32>
    %512 = tpu.matmul %511, %509, %cst_168 {dimension_numbers = #tpu.dot_dimension_numbers<[1], [0], [0], [1], [0, 0, 1, 1], [], []>} : vector<8x72xbf16>, vector<72x128xbf16>, vector<8x128xf32> -> vector<8x128xf32>
    %c88 = arith.constant 88 : index
    %c0_169 = arith.constant 0 : index
    %513 = vector.load %arg2[%c88, %c0_169] : memref<136x1xf32, #tpu.memory_space<vmem>>, vector<8x1xf32>
    %c88_170 = arith.constant 88 : index
    %c0_171 = arith.constant 0 : index
    %514 = vector.load %arg3[%c88_170, %c0_171] : memref<136x1xf32, #tpu.memory_space<vmem>>, vector<8x1xf32>
    %cst_172 = arith.constant dense<0.000000e+00> : vector<8xf32>
    %515 = vector.multi_reduction <add>, %512, %cst_172 [1] : vector<8x128xf32> to vector<8xf32>
    %516 = vector.shape_cast %515 : vector<8xf32> to vector<8x1xf32>
    %cst_173 = arith.constant 7.812500e-03 : f32
    %517 = vector.broadcast %cst_173 : f32 to vector<8x1xf32>
    %518 = arith.mulf %516, %517 : vector<8x1xf32>
    %519 = vector.broadcast %518 : vector<8x1xf32> to vector<8x128xf32>
    %520 = arith.subf %512, %519 : vector<8x128xf32>
    %521 = arith.mulf %520, %520 : vector<8x128xf32>
    %cst_174 = arith.constant dense<0.000000e+00> : vector<8xf32>
    %522 = vector.multi_reduction <add>, %521, %cst_174 [1] : vector<8x128xf32> to vector<8xf32>
    %523 = vector.shape_cast %522 : vector<8xf32> to vector<8x1xf32>
    %cst_175 = arith.constant 7.812500e-03 : f32
    %524 = vector.broadcast %cst_175 : f32 to vector<8x1xf32>
    %525 = arith.mulf %523, %524 : vector<8x1xf32>
    %cst_176 = arith.constant 9.99999974E-6 : f32
    %526 = vector.broadcast %cst_176 : f32 to vector<8x1xf32>
    %527 = arith.addf %525, %526 : vector<8x1xf32>
    %528 = math.rsqrt %527 : vector<8x1xf32>
    %529 = arith.mulf %528, %513 : vector<8x1xf32>
    %530 = vector.broadcast %529 : vector<8x1xf32> to vector<8x128xf32>
    %531 = arith.mulf %520, %530 : vector<8x128xf32>
    %532 = vector.broadcast %514 : vector<8x1xf32> to vector<8x128xf32>
    %533 = arith.addf %531, %532 : vector<8x128xf32>
    %cst_177 = arith.constant 0.000000e+00 : f32
    %534 = vector.broadcast %cst_177 : f32 to vector<8x128xf32>
    %535 = arith.maximumf %533, %534 : vector<8x128xf32>
    %c9_i32_178 = arith.constant 9 : i32
    %536 = tpu.dynamic_rotate %535 by %c9_i32_178 dim 1 : vector<8x128xf32>, i32 -> vector<8x128xf32>
    %537 = vector.extract_strided_slice %0 {offsets = [0, 0], sizes = [1, 128], strides = [1, 1]} : vector<9x128xf32> to vector<1x128xf32>
    %538 = vector.broadcast %537 : vector<1x128xf32> to vector<8x128xf32>
    %539 = arith.mulf %536, %538 : vector<8x128xf32>
    %c8_i32_179 = arith.constant 8 : i32
    %540 = tpu.dynamic_rotate %535 by %c8_i32_179 dim 1 : vector<8x128xf32>, i32 -> vector<8x128xf32>
    %541 = vector.extract_strided_slice %0 {offsets = [1, 0], sizes = [1, 128], strides = [1, 1]} : vector<9x128xf32> to vector<1x128xf32>
    %542 = vector.broadcast %541 : vector<1x128xf32> to vector<8x128xf32>
    %543 = arith.mulf %540, %542 : vector<8x128xf32>
    %c7_i32_180 = arith.constant 7 : i32
    %544 = tpu.dynamic_rotate %535 by %c7_i32_180 dim 1 : vector<8x128xf32>, i32 -> vector<8x128xf32>
    %545 = vector.extract_strided_slice %0 {offsets = [2, 0], sizes = [1, 128], strides = [1, 1]} : vector<9x128xf32> to vector<1x128xf32>
    %546 = vector.broadcast %545 : vector<1x128xf32> to vector<8x128xf32>
    %547 = arith.mulf %544, %546 : vector<8x128xf32>
    %c1_i32_181 = arith.constant 1 : i32
    %548 = tpu.dynamic_rotate %535 by %c1_i32_181 dim 1 : vector<8x128xf32>, i32 -> vector<8x128xf32>
    %549 = vector.extract_strided_slice %0 {offsets = [3, 0], sizes = [1, 128], strides = [1, 1]} : vector<9x128xf32> to vector<1x128xf32>
    %550 = vector.broadcast %549 : vector<1x128xf32> to vector<8x128xf32>
    %551 = arith.mulf %548, %550 : vector<8x128xf32>
    %c127_i32_182 = arith.constant 127 : i32
    %552 = tpu.dynamic_rotate %535 by %c127_i32_182 dim 1 : vector<8x128xf32>, i32 -> vector<8x128xf32>
    %553 = vector.extract_strided_slice %0 {offsets = [5, 0], sizes = [1, 128], strides = [1, 1]} : vector<9x128xf32> to vector<1x128xf32>
    %554 = vector.broadcast %553 : vector<1x128xf32> to vector<8x128xf32>
    %555 = arith.mulf %552, %554 : vector<8x128xf32>
    %c121_i32_183 = arith.constant 121 : i32
    %556 = tpu.dynamic_rotate %535 by %c121_i32_183 dim 1 : vector<8x128xf32>, i32 -> vector<8x128xf32>
    %557 = vector.extract_strided_slice %0 {offsets = [6, 0], sizes = [1, 128], strides = [1, 1]} : vector<9x128xf32> to vector<1x128xf32>
    %558 = vector.broadcast %557 : vector<1x128xf32> to vector<8x128xf32>
    %559 = arith.mulf %556, %558 : vector<8x128xf32>
    %c120_i32_184 = arith.constant 120 : i32
    %560 = tpu.dynamic_rotate %535 by %c120_i32_184 dim 1 : vector<8x128xf32>, i32 -> vector<8x128xf32>
    %561 = vector.extract_strided_slice %0 {offsets = [7, 0], sizes = [1, 128], strides = [1, 1]} : vector<9x128xf32> to vector<1x128xf32>
    %562 = vector.broadcast %561 : vector<1x128xf32> to vector<8x128xf32>
    %563 = arith.mulf %560, %562 : vector<8x128xf32>
    %c119_i32_185 = arith.constant 119 : i32
    %564 = tpu.dynamic_rotate %535 by %c119_i32_185 dim 1 : vector<8x128xf32>, i32 -> vector<8x128xf32>
    %565 = vector.extract_strided_slice %0 {offsets = [8, 0], sizes = [1, 128], strides = [1, 1]} : vector<9x128xf32> to vector<1x128xf32>
    %566 = vector.broadcast %565 : vector<1x128xf32> to vector<8x128xf32>
    %567 = arith.mulf %564, %566 : vector<8x128xf32>
    %568 = tpu.concatenate %539, %543, %547, %551, %535, %555, %559, %563, %567 in 0 : vector<8x128xf32>, vector<8x128xf32>, vector<8x128xf32>, vector<8x128xf32>, vector<8x128xf32>, vector<8x128xf32>, vector<8x128xf32>, vector<8x128xf32>, vector<8x128xf32> -> vector<72x128xf32>
    %569 = arith.truncf %568 : vector<72x128xf32> to vector<72x128xbf16>
    %c9 = arith.constant 9 : index
    %c0_186 = arith.constant 0 : index
    %c0_187 = arith.constant 0 : index
    %570 = vector.load %arg1[%c9, %c0_186, %c0_187] : memref<12x8x128xbf16, #tpu.memory_space<vmem>>, vector<1x8x72xbf16>
    %571 = vector.shape_cast %570 : vector<1x8x72xbf16> to vector<8x72xbf16>
    %cst_188 = arith.constant dense<0.000000e+00> : vector<8x128xf32>
    %572 = tpu.matmul %571, %569, %cst_188 {dimension_numbers = #tpu.dot_dimension_numbers<[1], [0], [0], [1], [0, 0, 1, 1], [], []>} : vector<8x72xbf16>, vector<72x128xbf16>, vector<8x128xf32> -> vector<8x128xf32>
    %573 = arith.addf %572, %452 : vector<8x128xf32>
    %574 = tpu.concatenate %452, %573, %61, %331 in 0 : vector<8x128xf32>, vector<8x128xf32>, vector<8x128xf32>, vector<8x128xf32> -> vector<32x128xf32>
    %c96 = arith.constant 96 : index
    %c0_189 = arith.constant 0 : index
    %575 = vector.load %arg2[%c96, %c0_189] : memref<136x1xf32, #tpu.memory_space<vmem>>, vector<32x1xf32>
    %c96_190 = arith.constant 96 : index
    %c0_191 = arith.constant 0 : index
    %576 = vector.load %arg3[%c96_190, %c0_191] : memref<136x1xf32, #tpu.memory_space<vmem>>, vector<32x1xf32>
    %cst_192 = arith.constant dense<0.000000e+00> : vector<32xf32>
    %577 = vector.multi_reduction <add>, %574, %cst_192 [1] : vector<32x128xf32> to vector<32xf32>
    %578 = vector.shape_cast %577 : vector<32xf32> to vector<32x1xf32>
    %cst_193 = arith.constant 7.812500e-03 : f32
    %579 = vector.broadcast %cst_193 : f32 to vector<32x1xf32>
    %580 = arith.mulf %578, %579 : vector<32x1xf32>
    %581 = vector.broadcast %580 : vector<32x1xf32> to vector<32x128xf32>
    %582 = arith.subf %574, %581 : vector<32x128xf32>
    %583 = arith.mulf %582, %582 : vector<32x128xf32>
    %cst_194 = arith.constant dense<0.000000e+00> : vector<32xf32>
    %584 = vector.multi_reduction <add>, %583, %cst_194 [1] : vector<32x128xf32> to vector<32xf32>
    %585 = vector.shape_cast %584 : vector<32xf32> to vector<32x1xf32>
    %cst_195 = arith.constant 7.812500e-03 : f32
    %586 = vector.broadcast %cst_195 : f32 to vector<32x1xf32>
    %587 = arith.mulf %585, %586 : vector<32x1xf32>
    %cst_196 = arith.constant 9.99999974E-6 : f32
    %588 = vector.broadcast %cst_196 : f32 to vector<32x1xf32>
    %589 = arith.addf %587, %588 : vector<32x1xf32>
    %590 = math.rsqrt %589 : vector<32x1xf32>
    %591 = arith.mulf %590, %575 : vector<32x1xf32>
    %592 = vector.broadcast %591 : vector<32x1xf32> to vector<32x128xf32>
    %593 = arith.mulf %582, %592 : vector<32x128xf32>
    %594 = vector.broadcast %576 : vector<32x1xf32> to vector<32x128xf32>
    %595 = arith.addf %593, %594 : vector<32x128xf32>
    %cst_197 = arith.constant 0.000000e+00 : f32
    %596 = vector.broadcast %cst_197 : f32 to vector<32x128xf32>
    %597 = arith.maximumf %595, %596 : vector<32x128xf32>
    %c10 = arith.constant 10 : index
    %c0_198 = arith.constant 0 : index
    %c0_199 = arith.constant 0 : index
    %598 = vector.load %arg1[%c10, %c0_198, %c0_199] : memref<12x8x128xbf16, #tpu.memory_space<vmem>>, vector<1x8x32xbf16>
    %599 = vector.shape_cast %598 : vector<1x8x32xbf16> to vector<8x32xbf16>
    %600 = arith.truncf %597 : vector<32x128xf32> to vector<32x128xbf16>
    %cst_200 = arith.constant dense<0.000000e+00> : vector<8x128xf32>
    %601 = tpu.matmul %599, %600, %cst_200 {dimension_numbers = #tpu.dot_dimension_numbers<[1], [0], [0], [1], [0, 0, 1, 1], [], []>} : vector<8x32xbf16>, vector<32x128xbf16>, vector<8x128xf32> -> vector<8x128xf32>
    %c128 = arith.constant 128 : index
    %c0_201 = arith.constant 0 : index
    %602 = vector.load %arg2[%c128, %c0_201] : memref<136x1xf32, #tpu.memory_space<vmem>>, vector<8x1xf32>
    %c128_202 = arith.constant 128 : index
    %c0_203 = arith.constant 0 : index
    %603 = vector.load %arg3[%c128_202, %c0_203] : memref<136x1xf32, #tpu.memory_space<vmem>>, vector<8x1xf32>
    %cst_204 = arith.constant dense<0.000000e+00> : vector<8xf32>
    %604 = vector.multi_reduction <add>, %601, %cst_204 [1] : vector<8x128xf32> to vector<8xf32>
    %605 = vector.shape_cast %604 : vector<8xf32> to vector<8x1xf32>
    %cst_205 = arith.constant 7.812500e-03 : f32
    %606 = vector.broadcast %cst_205 : f32 to vector<8x1xf32>
    %607 = arith.mulf %605, %606 : vector<8x1xf32>
    %608 = vector.broadcast %607 : vector<8x1xf32> to vector<8x128xf32>
    %609 = arith.subf %601, %608 : vector<8x128xf32>
    %610 = arith.mulf %609, %609 : vector<8x128xf32>
    %cst_206 = arith.constant dense<0.000000e+00> : vector<8xf32>
    %611 = vector.multi_reduction <add>, %610, %cst_206 [1] : vector<8x128xf32> to vector<8xf32>
    %612 = vector.shape_cast %611 : vector<8xf32> to vector<8x1xf32>
    %cst_207 = arith.constant 7.812500e-03 : f32
    %613 = vector.broadcast %cst_207 : f32 to vector<8x1xf32>
    %614 = arith.mulf %612, %613 : vector<8x1xf32>
    %cst_208 = arith.constant 9.99999974E-6 : f32
    %615 = vector.broadcast %cst_208 : f32 to vector<8x1xf32>
    %616 = arith.addf %614, %615 : vector<8x1xf32>
    %617 = math.rsqrt %616 : vector<8x1xf32>
    %618 = arith.mulf %617, %602 : vector<8x1xf32>
    %619 = vector.broadcast %618 : vector<8x1xf32> to vector<8x128xf32>
    %620 = arith.mulf %609, %619 : vector<8x128xf32>
    %621 = vector.broadcast %603 : vector<8x1xf32> to vector<8x128xf32>
    %622 = arith.addf %620, %621 : vector<8x128xf32>
    %cst_209 = arith.constant 0.000000e+00 : f32
    %623 = vector.broadcast %cst_209 : f32 to vector<8x128xf32>
    %624 = arith.maximumf %622, %623 : vector<8x128xf32>
    %c9_i32_210 = arith.constant 9 : i32
    %625 = tpu.dynamic_rotate %624 by %c9_i32_210 dim 1 : vector<8x128xf32>, i32 -> vector<8x128xf32>
    %626 = vector.extract_strided_slice %0 {offsets = [0, 0], sizes = [1, 128], strides = [1, 1]} : vector<9x128xf32> to vector<1x128xf32>
    %627 = vector.broadcast %626 : vector<1x128xf32> to vector<8x128xf32>
    %628 = arith.mulf %625, %627 : vector<8x128xf32>
    %c8_i32_211 = arith.constant 8 : i32
    %629 = tpu.dynamic_rotate %624 by %c8_i32_211 dim 1 : vector<8x128xf32>, i32 -> vector<8x128xf32>
    %630 = vector.extract_strided_slice %0 {offsets = [1, 0], sizes = [1, 128], strides = [1, 1]} : vector<9x128xf32> to vector<1x128xf32>
    %631 = vector.broadcast %630 : vector<1x128xf32> to vector<8x128xf32>
    %632 = arith.mulf %629, %631 : vector<8x128xf32>
    %c7_i32_212 = arith.constant 7 : i32
    %633 = tpu.dynamic_rotate %624 by %c7_i32_212 dim 1 : vector<8x128xf32>, i32 -> vector<8x128xf32>
    %634 = vector.extract_strided_slice %0 {offsets = [2, 0], sizes = [1, 128], strides = [1, 1]} : vector<9x128xf32> to vector<1x128xf32>
    %635 = vector.broadcast %634 : vector<1x128xf32> to vector<8x128xf32>
    %636 = arith.mulf %633, %635 : vector<8x128xf32>
    %c1_i32_213 = arith.constant 1 : i32
    %637 = tpu.dynamic_rotate %624 by %c1_i32_213 dim 1 : vector<8x128xf32>, i32 -> vector<8x128xf32>
    %638 = vector.extract_strided_slice %0 {offsets = [3, 0], sizes = [1, 128], strides = [1, 1]} : vector<9x128xf32> to vector<1x128xf32>
    %639 = vector.broadcast %638 : vector<1x128xf32> to vector<8x128xf32>
    %640 = arith.mulf %637, %639 : vector<8x128xf32>
    %c127_i32_214 = arith.constant 127 : i32
    %641 = tpu.dynamic_rotate %624 by %c127_i32_214 dim 1 : vector<8x128xf32>, i32 -> vector<8x128xf32>
    %642 = vector.extract_strided_slice %0 {offsets = [5, 0], sizes = [1, 128], strides = [1, 1]} : vector<9x128xf32> to vector<1x128xf32>
    %643 = vector.broadcast %642 : vector<1x128xf32> to vector<8x128xf32>
    %644 = arith.mulf %641, %643 : vector<8x128xf32>
    %c121_i32_215 = arith.constant 121 : i32
    %645 = tpu.dynamic_rotate %624 by %c121_i32_215 dim 1 : vector<8x128xf32>, i32 -> vector<8x128xf32>
    %646 = vector.extract_strided_slice %0 {offsets = [6, 0], sizes = [1, 128], strides = [1, 1]} : vector<9x128xf32> to vector<1x128xf32>
    %647 = vector.broadcast %646 : vector<1x128xf32> to vector<8x128xf32>
    %648 = arith.mulf %645, %647 : vector<8x128xf32>
    %c120_i32_216 = arith.constant 120 : i32
    %649 = tpu.dynamic_rotate %624 by %c120_i32_216 dim 1 : vector<8x128xf32>, i32 -> vector<8x128xf32>
    %650 = vector.extract_strided_slice %0 {offsets = [7, 0], sizes = [1, 128], strides = [1, 1]} : vector<9x128xf32> to vector<1x128xf32>
    %651 = vector.broadcast %650 : vector<1x128xf32> to vector<8x128xf32>
    %652 = arith.mulf %649, %651 : vector<8x128xf32>
    %c119_i32_217 = arith.constant 119 : i32
    %653 = tpu.dynamic_rotate %624 by %c119_i32_217 dim 1 : vector<8x128xf32>, i32 -> vector<8x128xf32>
    %654 = vector.extract_strided_slice %0 {offsets = [8, 0], sizes = [1, 128], strides = [1, 1]} : vector<9x128xf32> to vector<1x128xf32>
    %655 = vector.broadcast %654 : vector<1x128xf32> to vector<8x128xf32>
    %656 = arith.mulf %653, %655 : vector<8x128xf32>
    %657 = tpu.concatenate %628, %632, %636, %640, %624, %644, %648, %652, %656 in 0 : vector<8x128xf32>, vector<8x128xf32>, vector<8x128xf32>, vector<8x128xf32>, vector<8x128xf32>, vector<8x128xf32>, vector<8x128xf32>, vector<8x128xf32>, vector<8x128xf32> -> vector<72x128xf32>
    %658 = arith.truncf %657 : vector<72x128xf32> to vector<72x128xbf16>
    %c11 = arith.constant 11 : index
    %c0_218 = arith.constant 0 : index
    %c0_219 = arith.constant 0 : index
    %659 = vector.load %arg1[%c11, %c0_218, %c0_219] : memref<12x8x128xbf16, #tpu.memory_space<vmem>>, vector<1x4x72xbf16>
    %660 = vector.shape_cast %659 : vector<1x4x72xbf16> to vector<4x72xbf16>
    %cst_220 = arith.constant dense<0.000000e+00> : vector<4x128xf32>
    %661 = tpu.matmul %660, %658, %cst_220 {dimension_numbers = #tpu.dot_dimension_numbers<[1], [0], [0], [1], [0, 0, 1, 1], [], []>} : vector<4x72xbf16>, vector<72x128xbf16>, vector<4x128xf32> -> vector<4x128xf32>
    %662 = arith.addf %661, %1 : vector<4x128xf32>
    %c0_221 = arith.constant 0 : index
    %c0_222 = arith.constant 0 : index
    %663 = vector.load %arg5[%c0_221, %c0_222] : memref<4x128xf32, #tpu.memory_space<vmem>>, vector<4x128xf32>
    tpu.vector_store %arg5[%c0_221, %c0_222], %662 {strides = array<i32>} : memref<4x128xf32, #tpu.memory_space<vmem>>, vector<4x128xf32>,
    return
  }
}

</mosaic_0001>

<llo_original>
// kernel: memnet_forward.1
$region0: #{memnet_forward.1}
  #allocation0 [shape = 'u32[]', space=smem, size = 0x4, offset = 0x4, fixed_abs, tag = 'smem constant byte address 0x4 - core index']
  #allocation1 [shape = 'u32[144,128]{1,0:T(1,128)}', space=vmem, size = 0x12000, scoped, tag = 'internal scratch']
  %s0 = inlined_call_operand.vmem [shape: f32[4,128], index: 0, kind: input, shape index: {}]
  %s1 = inlined_call_operand.vmem [shape: bf16[12,8,128], index: 1, kind: input, shape index: {}]
  %s2 = inlined_call_operand.vmem [shape: f32[136,1], index: 2, kind: input, shape index: {}]
  %s3 = inlined_call_operand.vmem [shape: f32[136,1], index: 3, kind: input, shape index: {}]
  %s4 = inlined_call_operand.vmem [shape: f32[9,128], index: 4, kind: input, shape index: {}]
  %s5 = inlined_call_operand.vmem [shape: f32[4,128], index: 5, kind: output, shape index: {}]
  %s6 = sld [smem:[#allocation0]]
  $region30: #{memnet_forward.1} parent=0
    _
  %s8 = ssub.s32 1, %s6
  %s9 = scalar_select 0, %s8, %s6
  // Predicated region
  $region2: #{memnet_forward.1} parent=0 // pred_check
    _
  $region3: #{memnet_forward.1} parent=0 // pred_check_branch
    %11 = sbr.rel (0) target = $region5
  $region4: #{memnet_forward.1} parent=0 // pred_region
    _
  $region5: #{memnet_forward.1} parent=0 // pred_fallthru
    _
  // Predicated region
  $region6: #{memnet_forward.1} parent=0 // pred_check
    _
  $region7: #{memnet_forward.1} parent=0 // pred_check_branch
    %13 = sbr.rel (0) target = $region9
  $region8: #{memnet_forward.1} parent=0 // pred_region
    _
  $region9: #{memnet_forward.1} parent=0 // pred_fallthru
    _
  // Predicated region
  $region10: #{memnet_forward.1} parent=0 // pred_check
    _
  $region11: #{memnet_forward.1} parent=0 // pred_check_branch
    %15 = sbr.rel (0) target = $region13
  $region12: #{memnet_forward.1} parent=0 // pred_region
    _
  $region13: #{memnet_forward.1} parent=0 // pred_fallthru
    _
  // Predicated region
  $region14: #{memnet_forward.1} parent=0 // pred_check
    _
  $region15: #{memnet_forward.1} parent=0 // pred_check_branch
    %17 = sbr.rel (0) target = $region17
  $region16: #{memnet_forward.1} parent=0 // pred_region
    _
  $region17: #{memnet_forward.1} parent=0 // pred_fallthru
    _
  // Predicated region
  $region18: #{memnet_forward.1} parent=0 // pred_check
    _
  $region19: #{memnet_forward.1} parent=0 // pred_check_branch
    %19 = sbr.rel (0) target = $region21
  $region20: #{memnet_forward.1} parent=0 // pred_region
    _
  $region21: #{memnet_forward.1} parent=0 // pred_fallthru
    _
  %v21 = vld [vmem:[%s4] sm:$0xff]
  %v22 = vld [vmem:[%s4 + $0x8] sm:$0x1]
  %v23 = vld [vmem:[%s0] sm:$0xf]
  %v24 = vld [vmem:[%s2] sm:$0xf]
  %v25 = vld [vmem:[%s3] sm:$0xf]
  %vm26 = vcmask 1043456
  %v27 = vsel %vm26, %v23, 0.0
  %28 = vadd.xlane.f32.xlu0 %v27
  %v29 = vpop.xlane.xlu0 %28
  %v30 = vmul.f32 %v29, 0.0078125
  %v31 = vsub.f32 %v23, %v30
  %v32 = vmul.f32 %v31, %v31
  %v33 = vsel %vm26, %v32, 0.0
  %34 = vadd.xlane.f32.xlu0 %v33
  %v35 = vpop.xlane.xlu0 %34
  %v36 = vmul.f32 %v35, 0.0078125
  %v37 = vadd.f32 %v36, 1e-05
  %v38 = vrsqrt.pop %v37
  %v39 = vmul.f32 %v38, %v24
  %41 = vset.pattern.permute.xlu0 0
  %42 = vperm.xlu0 %41, %v39
  %v43 = vpop.permute.xlu0 %42
  %v45 = vmul.f32 %v31, %v43
  %47 = vset.pattern.permute.xlu0 0
  %48 = vperm.xlu0 %47, %v25
  %v49 = vpop.permute.xlu0 %48
  %v51 = vadd.f32 %v45, %v49
  %v52 = vmax.f32 %v51, 0.0
  %53 = vrot.lane.b32.xlu0 %v52, 9
  %v54 = vpop.permute.xlu0 %53
  %v55 = vlaneseq
  %v56 = vshrl.u32 %v55, 7
  %v57 = vsub.s32 0, %v56
  %v58 = vrot.slane %v21, %v57
  %v59 = vmul.f32 %v54, %v58
  %60 = vrot.lane.b32.xlu0 %v52, 8
  %v61 = vpop.permute.xlu0 %60
  %v62 = vlaneseq
  %v63 = vshrl.u32 %v62, 7
  %v64 = vsub.s32 1, %v63
  %v65 = vrot.slane %v21, %v64
  %v66 = vmul.f32 %v61, %v65
  %67 = vrot.lane.b32.xlu0 %v52, 7
  %v68 = vpop.permute.xlu0 %67
  %v69 = vlaneseq
  %v70 = vshrl.u32 %v69, 7
  %v71 = vsub.s32 2, %v70
  %v72 = vrot.slane %v21, %v71
  %v73 = vmul.f32 %v68, %v72
  %74 = vrot.lane.b32.xlu0 %v52, 1
  %v75 = vpop.permute.xlu0 %74
  %v76 = vlaneseq
  %v77 = vshrl.u32 %v76, 7
  %v78 = vsub.s32 3, %v77
  %v79 = vrot.slane %v21, %v78
  %v80 = vmul.f32 %v75, %v79
  %81 = vrot.lane.b32.xlu0 %v52, 127
  %v82 = vpop.permute.xlu0 %81
  %v83 = vlaneseq
  %v84 = vshrl.u32 %v83, 7
  %v85 = vsub.s32 5, %v84
  %v86 = vrot.slane %v21, %v85
  %v87 = vmul.f32 %v82, %v86
  %88 = vrot.lane.b32.xlu0 %v52, 121
  %v89 = vpop.permute.xlu0 %88
  %v90 = vlaneseq
  %v91 = vshrl.u32 %v90, 7
  %v92 = vsub.s32 6, %v91
  %v93 = vrot.slane %v21, %v92
  %v94 = vmul.f32 %v89, %v93
  %95 = vrot.lane.b32.xlu0 %v52, 120
  %v96 = vpop.permute.xlu0 %95
  %v97 = vlaneseq
  %v98 = vshrl.u32 %v97, 7
  %v99 = vsub.s32 7, %v98
  %v100 = vrot.slane %v21, %v99
  %v101 = vmul.f32 %v96, %v100
  %102 = vrot.lane.b32.xlu0 %v52, 119
  %v103 = vpop.permute.xlu0 %102
  %v104 = vlaneseq
  %v105 = vshrl.u32 %v104, 7
  %v106 = vsub.s32 0, %v105
  %v107 = vrot.slane %v22, %v106
  %v108 = vmul.f32 %v103, %v107
  %v110 = vrot.slane %v66, 4
  %v113 = vrot.slane %v80, 4
  %v116 = vrot.slane %v87, 4
  %v119 = vrot.slane %v101, 4
  %v121 = vsel %vm26, %v59, %v110
  %v122 = vsel %vm26, %v73, %v113
  %v123 = vsel %vm26, %v52, %v116
  %v124 = vsel %vm26, %v94, %v119
  %v125 = vpack.c.bf16 %v122, %v121
  %v126 = vpack.c.bf16 %v124, %v123
  %v127 = vpack.c.bf16 %v108, %v108
  %v128 = vld [vmem:[%s1] sm:$0xf]
  %vm129 = vcmask 293888
  %v131 = vsel %vm129, %v128, 0
  %vm133 = vcmask 1041408
  %v135 = vsel %vm133, %v127, 0
  %137 = vmatprep.subr.bf16.mxu0 0
  %138 = vmatpush1.bf16.msra.mxu0 0
  %139 = vmatprep.subr.bf16.mxu0 0
  %140 = vmatpush1.bf16.msra.mxu0 0
  %141 = vmatprep.subr.bf16.mxu0 0
  %142 = vmatpush1.bf16.msra.mxu0 0
  %143 = vmatprep.subr.bf16.mxu0 0
  %144 = vmatpush1.bf16.msra.mxu0 0
  %145 = vmatprep.subr.bf16.mxu0 0
  %146 = vmatpush1.bf16.msra.mxu0 0
  %147 = vmatprep.subr.bf16.mxu0 0
  %148 = vmatpush1.bf16.msra.mxu0 %v135
  %149 = vmatprep.subr.bf16.mxu0 0
  %150 = vmatpush1.bf16.msra.mxu0 %v126
  %151 = vmatprep.subr.bf16.mxu0 0
  %152 = vmatpush1.bf16.msra.mxu0 %v125
  %153 = vmatprep.subr.bf16.mxu0 0
  %154 = vmatpush2.bf16.msra.mxu0 0
  %155 = vmatprep.subr.bf16.mxu0 0
  %156 = vmatpush2.bf16.msra.mxu0 0
  %157 = vmatprep.subr.bf16.mxu0 0
  %158 = vmatpush2.bf16.msra.mxu0 0
  %159 = vmatprep.subr.bf16.mxu0 0
  %160 = vmatpush2.bf16.msra.mxu0 0
  %161 = vmatprep.subr.bf16.mxu0 0
  %162 = vmatpush2.bf16.msra.mxu0 0
  %163 = vmatprep.subr.bf16.mxu0 0
  %164 = vmatpush2.bf16.msra.mxu0 0
  %165 = vmatprep.subr.bf16.mxu0 0
  %166 = vmatpush2.bf16.msra.mxu0 0
  %167 = vmatprep.subr.bf16.mxu0 0
  %168 = vmatpush2.bf16.msra.mxu0 0
  %169 = vmatprep.mubr.bf16.mxu0 0
  %170 = vmatmul.mubr.bf16.gmra.mxu0 %v131
  %v171 = vpop.f32.mrf.mxu0
  %v172 = vadd.f32 0.0, %v171
  %v173 = vpop.f32.mrf.mxu0
  %v174 = vpop.f32.mrf.mxu0
  %v175 = vpop.f32.mrf.mxu0
  %176 = vdwg.mxu0
  %v177 = vld [vmem:[%s2 + $0x8] sm:$0xff]
  %v178 = vld [vmem:[%s3 + $0x8] sm:$0xff]
  %179 = vadd.xlane.f32.xlu0 %v172
  %v180 = vpop.xlane.xlu0 %179
  %v181 = vmul.f32 %v180, 0.0078125
  %v182 = vsub.f32 %v172, %v181
  %v183 = vmul.f32 %v182, %v182
  %184 = vadd.xlane.f32.xlu0 %v183
  %v185 = vpop.xlane.xlu0 %184
  %v186 = vmul.f32 %v185, 0.0078125
  %v187 = vadd.f32 %v186, 1e-05
  %v188 = vrsqrt.pop %v187
  %v189 = vmul.f32 %v188, %v177
  %191 = vset.pattern.permute.xlu0 0
  %192 = vperm.xlu0 %191, %v189
  %v193 = vpop.permute.xlu0 %192
  %v195 = vmul.f32 %v182, %v193
  %197 = vset.pattern.permute.xlu0 0
  %198 = vperm.xlu0 %197, %v178
  %v199 = vpop.permute.xlu0 %198
  %v201 = vadd.f32 %v195, %v199
  %v202 = vmax.f32 %v201, 0.0
  %203 = vrot.lane.b32.xlu0 %v202, 9
  %v204 = vpop.permute.xlu0 %203
  %v205 = vmul.f32 %v204, %v58
  %206 = vrot.lane.b32.xlu0 %v202, 8
  %v207 = vpop.permute.xlu0 %206
  %v208 = vmul.f32 %v207, %v65
  %209 = vrot.lane.b32.xlu0 %v202, 7
  %v210 = vpop.permute.xlu0 %209
  %v211 = vmul.f32 %v210, %v72
  %212 = vrot.lane.b32.xlu0 %v202, 1
  %v213 = vpop.permute.xlu0 %212
  %v214 = vmul.f32 %v213, %v79
  %215 = vrot.lane.b32.xlu0 %v202, 127
  %v216 = vpop.permute.xlu0 %215
  %v217 = vmul.f32 %v216, %v86
  %218 = vrot.lane.b32.xlu0 %v202, 121
  %v219 = vpop.permute.xlu0 %218
  %v220 = vmul.f32 %v219, %v93
  %221 = vrot.lane.b32.xlu0 %v202, 120
  %v222 = vpop.permute.xlu0 %221
  %v223 = vmul.f32 %v222, %v100
  %224 = vrot.lane.b32.xlu0 %v202, 119
  %v225 = vpop.permute.xlu0 %224
  %v226 = vmul.f32 %v225, %v107
  %v227 = vpack.c.bf16 %v208, %v205
  %v228 = vpack.c.bf16 %v214, %v211
  %v229 = vpack.c.bf16 %v217, %v202
  %v230 = vpack.c.bf16 %v223, %v220
  %v231 = vpack.c.bf16 %v226, %v226
  %s232 = scalar_lea.vmem %s1, 4
  %v233 = vld [vmem:[%s232] sm:$0xf]
  %vm234 = vcmask 588800
  %v236 = vsel %vm234, %v233, 0
  %v239 = vsel %vm26, %v231, 0
  %241 = vmatprep.subr.bf16.mxu0 0
  %242 = vmatpush1.bf16.msra.mxu0 0
  %243 = vmatprep.subr.bf16.mxu0 0
  %244 = vmatpush1.bf16.msra.mxu0 0
  %245 = vmatprep.subr.bf16.mxu0 0
  %246 = vmatpush1.bf16.msra.mxu0 0
  %247 = vmatprep.subr.bf16.mxu0 0
  %248 = vmatpush1.bf16.msra.mxu0 %v239
  %249 = vmatprep.subr.bf16.mxu0 0
  %250 = vmatpush1.bf16.msra.mxu0 %v230
  %251 = vmatprep.subr.bf16.mxu0 0
  %252 = vmatpush1.bf16.msra.mxu0 %v229
  %253 = vmatprep.subr.bf16.mxu0 0
  %254 = vmatpush1.bf16.msra.mxu0 %v228
  %255 = vmatprep.subr.bf16.mxu0 0
  %256 = vmatpush1.bf16.msra.mxu0 %v227
  %257 = vmatprep.subr.bf16.mxu0 0
  %258 = vmatpush2.bf16.msra.mxu0 0
  %259 = vmatprep.subr.bf16.mxu0 0
  %260 = vmatpush2.bf16.msra.mxu0 0
  %261 = vmatprep.subr.bf16.mxu0 0
  %262 = vmatpush2.bf16.msra.mxu0 0
  %263 = vmatprep.subr.bf16.mxu0 0
  %264 = vmatpush2.bf16.msra.mxu0 0
  %265 = vmatprep.subr.bf16.mxu0 0
  %266 = vmatpush2.bf16.msra.mxu0 0
  %267 = vmatprep.subr.bf16.mxu0 0
  %268 = vmatpush2.bf16.msra.mxu0 0
  %269 = vmatprep.subr.bf16.mxu0 0
  %270 = vmatpush2.bf16.msra.mxu0 0
  %271 = vmatprep.subr.bf16.mxu0 0
  %272 = vmatpush2.bf16.msra.mxu0 0
  %273 = vmatprep.mubr.bf16.mxu0 0
  %274 = vmatmul.mubr.bf16.gmra.mxu0 %v236
  %v275 = vpop.f32.mrf.mxu0
  %v276 = vadd.f32 0.0, %v275
  %v277 = vpop.f32.mrf.mxu0
  %v278 = vpop.f32.mrf.mxu0
  %v279 = vpop.f32.mrf.mxu0
  %280 = vdwg.mxu0
  %v281 = vld [vmem:[%s2 + $0x10] sm:$0xff]
  %v282 = vld [vmem:[%s3 + $0x10] sm:$0xff]
  %283 = vadd.xlane.f32.xlu0 %v276
  %v284 = vpop.xlane.xlu0 %283
  %v285 = vmul.f32 %v284, 0.0078125
  %v286 = vsub.f32 %v276, %v285
  %v287 = vmul.f32 %v286, %v286
  %288 = vadd.xlane.f32.xlu0 %v287
  %v289 = vpop.xlane.xlu0 %288
  %v290 = vmul.f32 %v289, 0.0078125
  %v291 = vadd.f32 %v290, 1e-05
  %v292 = vrsqrt.pop %v291
  %v293 = vmul.f32 %v292, %v281
  %295 = vset.pattern.permute.xlu0 0
  %296 = vperm.xlu0 %295, %v293
  %v297 = vpop.permute.xlu0 %296
  %v299 = vmul.f32 %v286, %v297
  %301 = vset.pattern.permute.xlu0 0
  %302 = vperm.xlu0 %301, %v282
  %v303 = vpop.permute.xlu0 %302
  %v305 = vadd.f32 %v299, %v303
  %v306 = vmax.f32 %v305, 0.0
  %307 = vrot.lane.b32.xlu0 %v306, 9
  %v308 = vpop.permute.xlu0 %307
  %v309 = vmul.f32 %v308, %v58
  %310 = vrot.lane.b32.xlu0 %v306, 8
  %v311 = vpop.permute.xlu0 %310
  %v312 = vmul.f32 %v311, %v65
  %313 = vrot.lane.b32.xlu0 %v306, 7
  %v314 = vpop.permute.xlu0 %313
  %v315 = vmul.f32 %v314, %v72
  %316 = vrot.lane.b32.xlu0 %v306, 1
  %v317 = vpop.permute.xlu0 %316
  %v318 = vmul.f32 %v317, %v79
  %319 = vrot.lane.b32.xlu0 %v306, 127
  %v320 = vpop.permute.xlu0 %319
  %v321 = vmul.f32 %v320, %v86
  %322 = vrot.lane.b32.xlu0 %v306, 121
  %v323 = vpop.permute.xlu0 %322
  %v324 = vmul.f32 %v323, %v93
  %325 = vrot.lane.b32.xlu0 %v306, 120
  %v326 = vpop.permute.xlu0 %325
  %v327 = vmul.f32 %v326, %v100
  %328 = vrot.lane.b32.xlu0 %v306, 119
  %v329 = vpop.permute.xlu0 %328
  %v330 = vmul.f32 %v329, %v107
  %v331 = vpack.c.bf16 %v312, %v309
  %v332 = vpack.c.bf16 %v318, %v315
  %v333 = vpack.c.bf16 %v321, %v306
  %v334 = vpack.c.bf16 %v327, %v324
  %v335 = vpack.c.bf16 %v330, %v330
  %s336 = scalar_lea.vmem %s1, 8
  %v337 = vld [vmem:[%s336] sm:$0xf]
  %v339 = vsel %vm234, %v337, 0
  %v342 = vsel %vm26, %v335, 0
  %344 = vmatprep.subr.bf16.mxu0 0
  %345 = vmatpush1.bf16.msra.mxu0 0
  %346 = vmatprep.subr.bf16.mxu0 0
  %347 = vmatpush1.bf16.msra.mxu0 0
  %348 = vmatprep.subr.bf16.mxu0 0
  %349 = vmatpush1.bf16.msra.mxu0 0
  %350 = vmatprep.subr.bf16.mxu0 0
  %351 = vmatpush1.bf16.msra.mxu0 %v342
  %352 = vmatprep.subr.bf16.mxu0 0
  %353 = vmatpush1.bf16.msra.mxu0 %v334
  %354 = vmatprep.subr.bf16.mxu0 0
  %355 = vmatpush1.bf16.msra.mxu0 %v333
  %356 = vmatprep.subr.bf16.mxu0 0
  %357 = vmatpush1.bf16.msra.mxu0 %v332
  %358 = vmatprep.subr.bf16.mxu0 0
  %359 = vmatpush1.bf16.msra.mxu0 %v331
  %360 = vmatprep.subr.bf16.mxu0 0
  %361 = vmatpush2.bf16.msra.mxu0 0
  %362 = vmatprep.subr.bf16.mxu0 0
  %363 = vmatpush2.bf16.msra.mxu0 0
  %364 = vmatprep.subr.bf16.mxu0 0
  %365 = vmatpush2.bf16.msra.mxu0 0
  %366 = vmatprep.subr.bf16.mxu0 0
  %367 = vmatpush2.bf16.msra.mxu0 0
  %368 = vmatprep.subr.bf16.mxu0 0
  %369 = vmatpush2.bf16.msra.mxu0 0
  %370 = vmatprep.subr.bf16.mxu0 0
  %371 = vmatpush2.bf16.msra.mxu0 0
  %372 = vmatprep.subr.bf16.mxu0 0
  %373 = vmatpush2.bf16.msra.mxu0 0
  %374 = vmatprep.subr.bf16.mxu0 0
  %375 = vmatpush2.bf16.msra.mxu0 0
  %376 = vmatprep.mubr.bf16.mxu0 0
  %377 = vmatmul.mubr.bf16.gmra.mxu0 %v339
  %v378 = vpop.f32.mrf.mxu0
  %v379 = vadd.f32 %v172, %v378
  %v380 = vpop.f32.mrf.mxu0
  %v381 = vpop.f32.mrf.mxu0
  %v382 = vpop.f32.mrf.mxu0
  %383 = vdwg.mxu0
  %v384 = vld [vmem:[%s2 + $0x18] sm:$0xff]
  %v385 = vld [vmem:[%s3 + $0x18] sm:$0xff]
  %386 = vadd.xlane.f32.xlu0 %v379
  %v387 = vpop.xlane.xlu0 %386
  %v388 = vmul.f32 %v387, 0.0078125
  %v389 = vsub.f32 %v379, %v388
  %v390 = vmul.f32 %v389, %v389
  %391 = vadd.xlane.f32.xlu0 %v390
  %v392 = vpop.xlane.xlu0 %391
  %v393 = vmul.f32 %v392, 0.0078125
  %v394 = vadd.f32 %v393, 1e-05
  %v395 = vrsqrt.pop %v394
  %v396 = vmul.f32 %v395, %v384
  %398 = vset.pattern.permute.xlu0 0
  %399 = vperm.xlu0 %398, %v396
  %v400 = vpop.permute.xlu0 %399
  %v402 = vmul.f32 %v389, %v400
  %404 = vset.pattern.permute.xlu0 0
  %405 = vperm.xlu0 %404, %v385
  %v406 = vpop.permute.xlu0 %405
  %v408 = vadd.f32 %v402, %v406
  %v409 = vmax.f32 %v408, 0.0
  %410 = vrot.lane.b32.xlu0 %v409, 9
  %v411 = vpop.permute.xlu0 %410
  %v412 = vmul.f32 %v411, %v58
  %413 = vrot.lane.b32.xlu0 %v409, 8
  %v414 = vpop.permute.xlu0 %413
  %v415 = vmul.f32 %v414, %v65
  %416 = vrot.lane.b32.xlu0 %v409, 7
  %v417 = vpop.permute.xlu0 %416
  %v418 = vmul.f32 %v417, %v72
  %419 = vrot.lane.b32.xlu0 %v409, 1
  %v420 = vpop.permute.xlu0 %419
  %v421 = vmul.f32 %v420, %v79
  %422 = vrot.lane.b32.xlu0 %v409, 127
  %v423 = vpop.permute.xlu0 %422
  %v424 = vmul.f32 %v423, %v86
  %425 = vrot.lane.b32.xlu0 %v409, 121
  %v426 = vpop.permute.xlu0 %425
  %v427 = vmul.f32 %v426, %v93
  %428 = vrot.lane.b32.xlu0 %v409, 120
  %v429 = vpop.permute.xlu0 %428
  %v430 = vmul.f32 %v429, %v100
  %431 = vrot.lane.b32.xlu0 %v409, 119
  %v432 = vpop.permute.xlu0 %431
  %v433 = vmul.f32 %v432, %v107
  %v434 = vpack.c.bf16 %v415, %v412
  %v435 = vpack.c.bf16 %v421, %v418
  %v436 = vpack.c.bf16 %v424, %v409
  %v437 = vpack.c.bf16 %v430, %v427
  %v438 = vpack.c.bf16 %v433, %v433
  %s439 = scalar_lea.vmem %s1, 12
  %v440 = vld [vmem:[%s439] sm:$0xf]
  %v442 = vsel %vm234, %v440, 0
  %v445 = vsel %vm26, %v438, 0
  %447 = vmatprep.subr.bf16.mxu0 0
  %448 = vmatpush1.bf16.msra.mxu0 0
  %449 = vmatprep.subr.bf16.mxu0 0
  %450 = vmatpush1.bf16.msra.mxu0 0
  %451 = vmatprep.subr.bf16.mxu0 0
  %452 = vmatpush1.bf16.msra.mxu0 0
  %453 = vmatprep.subr.bf16.mxu0 0
  %454 = vmatpush1.bf16.msra.mxu0 %v445
  %455 = vmatprep.subr.bf16.mxu0 0
  %456 = vmatpush1.bf16.msra.mxu0 %v437
  %457 = vmatprep.subr.bf16.mxu0 0
  %458 = vmatpush1.bf16.msra.mxu0 %v436
  %459 = vmatprep.subr.bf16.mxu0 0
  %460 = vmatpush1.bf16.msra.mxu0 %v435
  %461 = vmatprep.subr.bf16.mxu0 0
  %462 = vmatpush1.bf16.msra.mxu0 %v434
  %463 = vmatprep.subr.bf16.mxu0 0
  %464 = vmatpush2.bf16.msra.mxu0 0
  %465 = vmatprep.subr.bf16.mxu0 0
  %466 = vmatpush2.bf16.msra.mxu0 0
  %467 = vmatprep.subr.bf16.mxu0 0
  %468 = vmatpush2.bf16.msra.mxu0 0
  %469 = vmatprep.subr.bf16.mxu0 0
  %470 = vmatpush2.bf16.msra.mxu0 0
  %471 = vmatprep.subr.bf16.mxu0 0
  %472 = vmatpush2.bf16.msra.mxu0 0
  %473 = vmatprep.subr.bf16.mxu0 0
  %474 = vmatpush2.bf16.msra.mxu0 0
  %475 = vmatprep.subr.bf16.mxu0 0
  %476 = vmatpush2.bf16.msra.mxu0 0
  %477 = vmatprep.subr.bf16.mxu0 0
  %478 = vmatpush2.bf16.msra.mxu0 0
  %479 = vmatprep.mubr.bf16.mxu0 0
  %480 = vmatmul.mubr.bf16.gmra.mxu0 %v442
  %v481 = vpop.f32.mrf.mxu0
  %v482 = vadd.f32 0.0, %v481
  %v483 = vpop.f32.mrf.mxu0
  %v484 = vpop.f32.mrf.mxu0
  %v485 = vpop.f32.mrf.mxu0
  %486 = vdwg.mxu0
  %v487 = vld [vmem:[%s2 + $0x20] sm:$0xff]
  %v488 = vld [vmem:[%s3 + $0x20] sm:$0xff]
  %489 = vadd.xlane.f32.xlu0 %v482
  %v490 = vpop.xlane.xlu0 %489
  %v491 = vmul.f32 %v490, 0.0078125
  %v492 = vsub.f32 %v482, %v491
  %v493 = vmul.f32 %v492, %v492
  %494 = vadd.xlane.f32.xlu0 %v493
  %v495 = vpop.xlane.xlu0 %494
  %v496 = vmul.f32 %v495, 0.0078125
  %v497 = vadd.f32 %v496, 1e-05
  %v498 = vrsqrt.pop %v497
  %v499 = vmul.f32 %v498, %v487
  %501 = vset.pattern.permute.xlu0 0
  %502 = vperm.xlu0 %501, %v499
  %v503 = vpop.permute.xlu0 %502
  %v505 = vmul.f32 %v492, %v503
  %507 = vset.pattern.permute.xlu0 0
  %508 = vperm.xlu0 %507, %v488
  %v509 = vpop.permute.xlu0 %508
  %v511 = vadd.f32 %v505, %v509
  %v512 = vmax.f32 %v511, 0.0
  %513 = vrot.lane.b32.xlu0 %v512, 9
  %v514 = vpop.permute.xlu0 %513
  %v515 = vmul.f32 %v514, %v58
  %516 = vrot.lane.b32.xlu0 %v512, 8
  %v517 = vpop.permute.xlu0 %516
  %v518 = vmul.f32 %v517, %v65
  %519 = vrot.lane.b32.xlu0 %v512, 7
  %v520 = vpop.permute.xlu0 %519
  %v521 = vmul.f32 %v520, %v72
  %522 = vrot.lane.b32.xlu0 %v512, 1
  %v523 = vpop.permute.xlu0 %522
  %v524 = vmul.f32 %v523, %v79
  %525 = vrot.lane.b32.xlu0 %v512, 127
  %v526 = vpop.permute.xlu0 %525
  %v527 = vmul.f32 %v526, %v86
  %528 = vrot.lane.b32.xlu0 %v512, 121
  %v529 = vpop.permute.xlu0 %528
  %v530 = vmul.f32 %v529, %v93
  %531 = vrot.lane.b32.xlu0 %v512, 120
  %v532 = vpop.permute.xlu0 %531
  %v533 = vmul.f32 %v532, %v100
  %534 = vrot.lane.b32.xlu0 %v512, 119
  %v535 = vpop.permute.xlu0 %534
  %v536 = vmul.f32 %v535, %v107
  %v537 = vpack.c.bf16 %v518, %v515
  %v538 = vpack.c.bf16 %v524, %v521
  %v539 = vpack.c.bf16 %v527, %v512
  %v540 = vpack.c.bf16 %v533, %v530
  %v541 = vpack.c.bf16 %v536, %v536
  %s542 = scalar_lea.vmem %s1, 16
  %v543 = vld [vmem:[%s542] sm:$0xf]
  %v545 = vsel %vm234, %v543, 0
  %v548 = vsel %vm26, %v541, 0
  %550 = vmatprep.subr.bf16.mxu0 0
  %551 = vmatpush1.bf16.msra.mxu0 0
  %552 = vmatprep.subr.bf16.mxu0 0
  %553 = vmatpush1.bf16.msra.mxu0 0
  %554 = vmatprep.subr.bf16.mxu0 0
  %555 = vmatpush1.bf16.msra.mxu0 0
  %556 = vmatprep.subr.bf16.mxu0 0
  %557 = vmatpush1.bf16.msra.mxu0 %v548
  %558 = vmatprep.subr.bf16.mxu0 0
  %559 = vmatpush1.bf16.msra.mxu0 %v540
  %560 = vmatprep.subr.bf16.mxu0 0
  %561 = vmatpush1.bf16.msra.mxu0 %v539
  %562 = vmatprep.subr.bf16.mxu0 0
  %563 = vmatpush1.bf16.msra.mxu0 %v538
  %564 = vmatprep.subr.bf16.mxu0 0
  %565 = vmatpush1.bf16.msra.mxu0 %v537
  %566 = vmatprep.subr.bf16.mxu0 0
  %567 = vmatpush2.bf16.msra.mxu0 0
  %568 = vmatprep.subr.bf16.mxu0 0
  %569 = vmatpush2.bf16.msra.mxu0 0
  %570 = vmatprep.subr.bf16.mxu0 0
  %571 = vmatpush2.bf16.msra.mxu0 0
  %572 = vmatprep.subr.bf16.mxu0 0
  %573 = vmatpush2.bf16.msra.mxu0 0
  %574 = vmatprep.subr.bf16.mxu0 0
  %575 = vmatpush2.bf16.msra.mxu0 0
  %576 = vmatprep.subr.bf16.mxu0 0
  %577 = vmatpush2.bf16.msra.mxu0 0
  %578 = vmatprep.subr.bf16.mxu0 0
  %579 = vmatpush2.bf16.msra.mxu0 0
  %580 = vmatprep.subr.bf16.mxu0 0
  %581 = vmatpush2.bf16.msra.mxu0 0
  %582 = vmatprep.mubr.bf16.mxu0 0
  %583 = vmatmul.mubr.bf16.gmra.mxu0 %v545
  %v584 = vpop.f32.mrf.mxu0
  %v585 = vadd.f32 %v379, %v584
  %v586 = vpop.f32.mrf.mxu0
  %v587 = vpop.f32.mrf.mxu0
  %v588 = vpop.f32.mrf.mxu0
  %589 = vdwg.mxu0
  %v590 = vld [vmem:[%s2 + $0x28] sm:$0xff]
  %v591 = vld [vmem:[%s2 + $0x30] sm:$0xff]
  %v592 = vld [vmem:[%s2 + $0x38] sm:$0xff]
  %v593 = vld [vmem:[%s3 + $0x28] sm:$0xff]
  %v594 = vld [vmem:[%s3 + $0x30] sm:$0xff]
  %v595 = vld [vmem:[%s3 + $0x38] sm:$0xff]
  %596 = vadd.xlane.f32.xlu0 %v585
  %v597 = vpop.xlane.xlu0 %596
  %v598 = vmul.f32 %v597, 0.0078125
  %v599 = vsub.f32 %v585, %v598
  %v600 = vmul.f32 %v599, %v599
  %601 = vadd.xlane.f32.xlu0 %v600
  %v602 = vpop.xlane.xlu0 %601
  %v603 = vmul.f32 %v602, 0.0078125
  %v604 = vadd.f32 %v603, 1e-05
  %v605 = vrsqrt.pop %v604
  %v606 = vmul.f32 %v395, %v590
  %v607 = vmul.f32 %v605, %v591
  %v608 = vmul.f32 %v188, %v592
  %610 = vset.pattern.permute.xlu0 0
  %611 = vperm.xlu0 %610, %v606
  %v612 = vpop.permute.xlu0 %611
  %615 = vset.pattern.permute.xlu0 0
  %616 = vperm.xlu0 %615, %v607
  %v617 = vpop.permute.xlu0 %616
  %620 = vset.pattern.permute.xlu0 0
  %621 = vperm.xlu0 %620, %v608
  %v622 = vpop.permute.xlu0 %621
  %v624 = vmul.f32 %v389, %v612
  %v625 = vmul.f32 %v599, %v617
  %v626 = vmul.f32 %v182, %v622
  %628 = vset.pattern.permute.xlu0 0
  %629 = vperm.xlu0 %628, %v593
  %v630 = vpop.permute.xlu0 %629
  %633 = vset.pattern.permute.xlu0 0
  %634 = vperm.xlu0 %633, %v594
  %v635 = vpop.permute.xlu0 %634
  %638 = vset.pattern.permute.xlu0 0
  %639 = vperm.xlu0 %638, %v595
  %v640 = vpop.permute.xlu0 %639
  %v642 = vadd.f32 %v624, %v630
  %v643 = vadd.f32 %v625, %v635
  %v644 = vadd.f32 %v626, %v640
  %v645 = vmax.f32 %v642, 0.0
  %v646 = vmax.f32 %v643, 0.0
  %v647 = vmax.f32 %v644, 0.0
  %s648 = scalar_lea.vmem %s1, 20
  %v649 = vld [vmem:[%s648] sm:$0xf]
  %v650 = vpack.c.bf16 %v646, %v645
  %v651 = vpack.c.bf16 %v647, %v647
  %vm652 = vcmask 195584
  %v654 = vsel %vm652, %v649, 0
  %v657 = vsel %vm26, %v651, 0
  %659 = vmatprep.subr.bf16.mxu0 0
  %660 = vmatpush1.bf16.msra.mxu0 0
  %661 = vmatprep.subr.bf16.mxu0 0
  %662 = vmatpush1.bf16.msra.mxu0 0
  %663 = vmatprep.subr.bf16.mxu0 0
  %664 = vmatpush1.bf16.msra.mxu0 0
  %665 = vmatprep.subr.bf16.mxu0 0
  %666 = vmatpush1.bf16.msra.mxu0 0
  %667 = vmatprep.subr.bf16.mxu0 0
  %668 = vmatpush1.bf16.msra.mxu0 0
  %669 = vmatprep.subr.bf16.mxu0 0
  %670 = vmatpush1.bf16.msra.mxu0 0
  %671 = vmatprep.subr.bf16.mxu0 0
  %672 = vmatpush1.bf16.msra.mxu0 %v657
  %673 = vmatprep.subr.bf16.mxu0 0
  %674 = vmatpush1.bf16.msra.mxu0 %v650
  %675 = vmatprep.subr.bf16.mxu0 0
  %676 = vmatpush2.bf16.msra.mxu0 0
  %677 = vmatprep.subr.bf16.mxu0 0
  %678 = vmatpush2.bf16.msra.mxu0 0
  %679 = vmatprep.subr.bf16.mxu0 0
  %680 = vmatpush2.bf16.msra.mxu0 0
  %681 = vmatprep.subr.bf16.mxu0 0
  %682 = vmatpush2.bf16.msra.mxu0 0
  %683 = vmatprep.subr.bf16.mxu0 0
  %684 = vmatpush2.bf16.msra.mxu0 0
  %685 = vmatprep.subr.bf16.mxu0 0
  %686 = vmatpush2.bf16.msra.mxu0 0
  %687 = vmatprep.subr.bf16.mxu0 0
  %688 = vmatpush2.bf16.msra.mxu0 0
  %689 = vmatprep.subr.bf16.mxu0 0
  %690 = vmatpush2.bf16.msra.mxu0 0
  %691 = vmatprep.mubr.bf16.mxu0 0
  %692 = vmatmul.mubr.bf16.gmra.mxu0 %v654
  %v693 = vpop.f32.mrf.mxu0
  %v694 = vadd.f32 0.0, %v693
  %v695 = vpop.f32.mrf.mxu0
  %v696 = vpop.f32.mrf.mxu0
  %v697 = vpop.f32.mrf.mxu0
  %698 = vdwg.mxu0
  %v699 = vld [vmem:[%s2 + $0x40] sm:$0xff]
  %v700 = vld [vmem:[%s3 + $0x40] sm:$0xff]
  %701 = vadd.xlane.f32.xlu0 %v694
  %v702 = vpop.xlane.xlu0 %701
  %v703 = vmul.f32 %v702, 0.0078125
  %v704 = vsub.f32 %v694, %v703
  %v705 = vmul.f32 %v704, %v704
  %706 = vadd.xlane.f32.xlu0 %v705
  %v707 = vpop.xlane.xlu0 %706
  %v708 = vmul.f32 %v707, 0.0078125
  %v709 = vadd.f32 %v708, 1e-05
  %v710 = vrsqrt.pop %v709
  %v711 = vmul.f32 %v710, %v699
  %713 = vset.pattern.permute.xlu0 0
  %714 = vperm.xlu0 %713, %v711
  %v715 = vpop.permute.xlu0 %714
  %v717 = vmul.f32 %v704, %v715
  %719 = vset.pattern.permute.xlu0 0
  %720 = vperm.xlu0 %719, %v700
  %v721 = vpop.permute.xlu0 %720
  %v723 = vadd.f32 %v717, %v721
  %v724 = vmax.f32 %v723, 0.0
  %725 = vrot.lane.b32.xlu0 %v724, 9
  %v726 = vpop.permute.xlu0 %725
  %v727 = vmul.f32 %v726, %v58
  %728 = vrot.lane.b32.xlu0 %v724, 8
  %v729 = vpop.permute.xlu0 %728
  %v730 = vmul.f32 %v729, %v65
  %731 = vrot.lane.b32.xlu0 %v724, 7
  %v732 = vpop.permute.xlu0 %731
  %v733 = vmul.f32 %v732, %v72
  %734 = vrot.lane.b32.xlu0 %v724, 1
  %v735 = vpop.permute.xlu0 %734
  %v736 = vmul.f32 %v735, %v79
  %737 = vrot.lane.b32.xlu0 %v724, 127
  %v738 = vpop.permute.xlu0 %737
  %v739 = vmul.f32 %v738, %v86
  %740 = vrot.lane.b32.xlu0 %v724, 121
  %v741 = vpop.permute.xlu0 %740
  %v742 = vmul.f32 %v741, %v93
  %743 = vrot.lane.b32.xlu0 %v724, 120
  %v744 = vpop.permute.xlu0 %743
  %v745 = vmul.f32 %v744, %v100
  %746 = vrot.lane.b32.xlu0 %v724, 119
  %v747 = vpop.permute.xlu0 %746
  %v748 = vmul.f32 %v747, %v107
  %v749 = vpack.c.bf16 %v730, %v727
  %v750 = vpack.c.bf16 %v736, %v733
  %v751 = vpack.c.bf16 %v739, %v724
  %v752 = vpack.c.bf16 %v745, %v742
  %v753 = vpack.c.bf16 %v748, %v748
  %s754 = scalar_lea.vmem %s1, 24
  %v755 = vld [vmem:[%s754] sm:$0xf]
  %v757 = vsel %vm234, %v755, 0
  %v760 = vsel %vm26, %v753, 0
  %762 = vmatprep.subr.bf16.mxu0 0
  %763 = vmatpush1.bf16.msra.mxu0 0
  %764 = vmatprep.subr.bf16.mxu0 0
  %765 = vmatpush1.bf16.msra.mxu0 0
  %766 = vmatprep.subr.bf16.mxu0 0
  %767 = vmatpush1.bf16.msra.mxu0 0
  %768 = vmatprep.subr.bf16.mxu0 0
  %769 = vmatpush1.bf16.msra.mxu0 %v760
  %770 = vmatprep.subr.bf16.mxu0 0
  %771 = vmatpush1.bf16.msra.mxu0 %v752
  %772 = vmatprep.subr.bf16.mxu0 0
  %773 = vmatpush1.bf16.msra.mxu0 %v751
  %774 = vmatprep.subr.bf16.mxu0 0
  %775 = vmatpush1.bf16.msra.mxu0 %v750
  %776 = vmatprep.subr.bf16.mxu0 0
  %777 = vmatpush1.bf16.msra.mxu0 %v749
  %778 = vmatprep.subr.bf16.mxu0 0
  %779 = vmatpush2.bf16.msra.mxu0 0
  %780 = vmatprep.subr.bf16.mxu0 0
  %781 = vmatpush2.bf16.msra.mxu0 0
  %782 = vmatprep.subr.bf16.mxu0 0
  %783 = vmatpush2.bf16.msra.mxu0 0
  %784 = vmatprep.subr.bf16.mxu0 0
  %785 = vmatpush2.bf16.msra.mxu0 0
  %786 = vmatprep.subr.bf16.mxu0 0
  %787 = vmatpush2.bf16.msra.mxu0 0
  %788 = vmatprep.subr.bf16.mxu0 0
  %789 = vmatpush2.bf16.msra.mxu0 0
  %790 = vmatprep.subr.bf16.mxu0 0
  %791 = vmatpush2.bf16.msra.mxu0 0
  %792 = vmatprep.subr.bf16.mxu0 0
  %793 = vmatpush2.bf16.msra.mxu0 0
  %794 = vmatprep.mubr.bf16.mxu0 0
  %795 = vmatmul.mubr.bf16.gmra.mxu0 %v757
  %v796 = vpop.f32.mrf.mxu0
  %v797 = vadd.f32 0.0, %v796
  %v798 = vpop.f32.mrf.mxu0
  %v799 = vpop.f32.mrf.mxu0
  %v800 = vpop.f32.mrf.mxu0
  %801 = vdwg.mxu0
  %v802 = vld [vmem:[%s2 + $0x48] sm:$0xff]
  %v803 = vld [vmem:[%s3 + $0x48] sm:$0xff]
  %804 = vadd.xlane.f32.xlu0 %v797
  %v805 = vpop.xlane.xlu0 %804
  %v806 = vmul.f32 %v805, 0.0078125
  %v807 = vsub.f32 %v797, %v806
  %v808 = vmul.f32 %v807, %v807
  %809 = vadd.xlane.f32.xlu0 %v808
  %v810 = vpop.xlane.xlu0 %809
  %v811 = vmul.f32 %v810, 0.0078125
  %v812 = vadd.f32 %v811, 1e-05
  %v813 = vrsqrt.pop %v812
  %v814 = vmul.f32 %v813, %v802
  %816 = vset.pattern.permute.xlu0 0
  %817 = vperm.xlu0 %816, %v814
  %v818 = vpop.permute.xlu0 %817
  %v820 = vmul.f32 %v807, %v818
  %822 = vset.pattern.permute.xlu0 0
  %823 = vperm.xlu0 %822, %v803
  %v824 = vpop.permute.xlu0 %823
  %v826 = vadd.f32 %v820, %v824
  %v827 = vmax.f32 %v826, 0.0
  %828 = vrot.lane.b32.xlu0 %v827, 9
  %v829 = vpop.permute.xlu0 %828
  %v830 = vmul.f32 %v829, %v58
  %831 = vrot.lane.b32.xlu0 %v827, 8
  %v832 = vpop.permute.xlu0 %831
  %v833 = vmul.f32 %v832, %v65
  %834 = vrot.lane.b32.xlu0 %v827, 7
  %v835 = vpop.permute.xlu0 %834
  %v836 = vmul.f32 %v835, %v72
  %837 = vrot.lane.b32.xlu0 %v827, 1
  %v838 = vpop.permute.xlu0 %837
  %v839 = vmul.f32 %v838, %v79
  %840 = vrot.lane.b32.xlu0 %v827, 127
  %v841 = vpop.permute.xlu0 %840
  %v842 = vmul.f32 %v841, %v86
  %843 = vrot.lane.b32.xlu0 %v827, 121
  %v844 = vpop.permute.xlu0 %843
  %v845 = vmul.f32 %v844, %v93
  %846 = vrot.lane.b32.xlu0 %v827, 120
  %v847 = vpop.permute.xlu0 %846
  %v848 = vmul.f32 %v847, %v100
  %849 = vrot.lane.b32.xlu0 %v827, 119
  %v850 = vpop.permute.xlu0 %849
  %v851 = vmul.f32 %v850, %v107
  %v852 = vpack.c.bf16 %v833, %v830
  %v853 = vpack.c.bf16 %v839, %v836
  %v854 = vpack.c.bf16 %v842, %v827
  %v855 = vpack.c.bf16 %v848, %v845
  %v856 = vpack.c.bf16 %v851, %v851
  %s857 = scalar_lea.vmem %s1, 28
  %v858 = vld [vmem:[%s857] sm:$0xf]
  %v860 = vsel %vm234, %v858, 0
  %v863 = vsel %vm26, %v856, 0
  %865 = vmatprep.subr.bf16.mxu0 0
  %866 = vmatpush1.bf16.msra.mxu0 0
  %867 = vmatprep.subr.bf16.mxu0 0
  %868 = vmatpush1.bf16.msra.mxu0 0
  %869 = vmatprep.subr.bf16.mxu0 0
  %870 = vmatpush1.bf16.msra.mxu0 0
  %871 = vmatprep.subr.bf16.mxu0 0
  %872 = vmatpush1.bf16.msra.mxu0 %v863
  %873 = vmatprep.subr.bf16.mxu0 0
  %874 = vmatpush1.bf16.msra.mxu0 %v855
  %875 = vmatprep.subr.bf16.mxu0 0
  %876 = vmatpush1.bf16.msra.mxu0 %v854
  %877 = vmatprep.subr.bf16.mxu0 0
  %878 = vmatpush1.bf16.msra.mxu0 %v853
  %879 = vmatprep.subr.bf16.mxu0 0
  %880 = vmatpush1.bf16.msra.mxu0 %v852
  %881 = vmatprep.subr.bf16.mxu0 0
  %882 = vmatpush2.bf16.msra.mxu0 0
  %883 = vmatprep.subr.bf16.mxu0 0
  %884 = vmatpush2.bf16.msra.mxu0 0
  %885 = vmatprep.subr.bf16.mxu0 0
  %886 = vmatpush2.bf16.msra.mxu0 0
  %887 = vmatprep.subr.bf16.mxu0 0
  %888 = vmatpush2.bf16.msra.mxu0 0
  %889 = vmatprep.subr.bf16.mxu0 0
  %890 = vmatpush2.bf16.msra.mxu0 0
  %891 = vmatprep.subr.bf16.mxu0 0
  %892 = vmatpush2.bf16.msra.mxu0 0
  %893 = vmatprep.subr.bf16.mxu0 0
  %894 = vmatpush2.bf16.msra.mxu0 0
  %895 = vmatprep.subr.bf16.mxu0 0
  %896 = vmatpush2.bf16.msra.mxu0 0
  %897 = vmatprep.mubr.bf16.mxu0 0
  %898 = vmatmul.mubr.bf16.gmra.mxu0 %v860
  %v899 = vpop.f32.mrf.mxu0
  %v900 = vadd.f32 %v694, %v899
  %v901 = vpop.f32.mrf.mxu0
  %v902 = vpop.f32.mrf.mxu0
  %v903 = vpop.f32.mrf.mxu0
  %904 = vdwg.mxu0
  %v905 = vld [vmem:[%s2 + $0x50] sm:$0xff]
  %v906 = vld [vmem:[%s3 + $0x50] sm:$0xff]
  %907 = vadd.xlane.f32.xlu0 %v900
  %v908 = vpop.xlane.xlu0 %907
  %v909 = vmul.f32 %v908, 0.0078125
  %v910 = vsub.f32 %v900, %v909
  %v911 = vmul.f32 %v910, %v910
  %912 = vadd.xlane.f32.xlu0 %v911
  %v913 = vpop.xlane.xlu0 %912
  %v914 = vmul.f32 %v913, 0.0078125
  %v915 = vadd.f32 %v914, 1e-05
  %v916 = vrsqrt.pop %v915
  %v917 = vmul.f32 %v916, %v905
  %919 = vset.pattern.permute.xlu0 0
  %920 = vperm.xlu0 %919, %v917
  %v921 = vpop.permute.xlu0 %920
  %v923 = vmul.f32 %v910, %v921
  %925 = vset.pattern.permute.xlu0 0
  %926 = vperm.xlu0 %925, %v906
  %v927 = vpop.permute.xlu0 %926
  %v929 = vadd.f32 %v923, %v927
  %v930 = vmax.f32 %v929, 0.0
  %931 = vrot.lane.b32.xlu0 %v930, 9
  %v932 = vpop.permute.xlu0 %931
  %v933 = vmul.f32 %v932, %v58
  %934 = vrot.lane.b32.xlu0 %v930, 8
  %v935 = vpop.permute.xlu0 %934
  %v936 = vmul.f32 %v935, %v65
  %937 = vrot.lane.b32.xlu0 %v930, 7
  %v938 = vpop.permute.xlu0 %937
  %v939 = vmul.f32 %v938, %v72
  %940 = vrot.lane.b32.xlu0 %v930, 1
  %v941 = vpop.permute.xlu0 %940
  %v942 = vmul.f32 %v941, %v79
  %943 = vrot.lane.b32.xlu0 %v930, 127
  %v944 = vpop.permute.xlu0 %943
  %v945 = vmul.f32 %v944, %v86
  %946 = vrot.lane.b32.xlu0 %v930, 121
  %v947 = vpop.permute.xlu0 %946
  %v948 = vmul.f32 %v947, %v93
  %949 = vrot.lane.b32.xlu0 %v930, 120
  %v950 = vpop.permute.xlu0 %949
  %v951 = vmul.f32 %v950, %v100
  %952 = vrot.lane.b32.xlu0 %v930, 119
  %v953 = vpop.permute.xlu0 %952
  %v954 = vmul.f32 %v953, %v107
  %v955 = vpack.c.bf16 %v936, %v933
  %v956 = vpack.c.bf16 %v942, %v939
  %v957 = vpack.c.bf16 %v945, %v930
  %v958 = vpack.c.bf16 %v951, %v948
  %v959 = vpack.c.bf16 %v954, %v954
  %s960 = scalar_lea.vmem %s1, 32
  %v961 = vld [vmem:[%s960] sm:$0xf]
  %v963 = vsel %vm234, %v961, 0
  %v966 = vsel %vm26, %v959, 0
  %968 = vmatprep.subr.bf16.mxu0 0
  %969 = vmatpush1.bf16.msra.mxu0 0
  %970 = vmatprep.subr.bf16.mxu0 0
  %971 = vmatpush1.bf16.msra.mxu0 0
  %972 = vmatprep.subr.bf16.mxu0 0
  %973 = vmatpush1.bf16.msra.mxu0 0
  %974 = vmatprep.subr.bf16.mxu0 0
  %975 = vmatpush1.bf16.msra.mxu0 %v966
  %976 = vmatprep.subr.bf16.mxu0 0
  %977 = vmatpush1.bf16.msra.mxu0 %v958
  %978 = vmatprep.subr.bf16.mxu0 0
  %979 = vmatpush1.bf16.msra.mxu0 %v957
  %980 = vmatprep.subr.bf16.mxu0 0
  %981 = vmatpush1.bf16.msra.mxu0 %v956
  %982 = vmatprep.subr.bf16.mxu0 0
  %983 = vmatpush1.bf16.msra.mxu0 %v955
  %984 = vmatprep.subr.bf16.mxu0 0
  %985 = vmatpush2.bf16.msra.mxu0 0
  %986 = vmatprep.subr.bf16.mxu0 0
  %987 = vmatpush2.bf16.msra.mxu0 0
  %988 = vmatprep.subr.bf16.mxu0 0
  %989 = vmatpush2.bf16.msra.mxu0 0
  %990 = vmatprep.subr.bf16.mxu0 0
  %991 = vmatpush2.bf16.msra.mxu0 0
  %992 = vmatprep.subr.bf16.mxu0 0
  %993 = vmatpush2.bf16.msra.mxu0 0
  %994 = vmatprep.subr.bf16.mxu0 0
  %995 = vmatpush2.bf16.msra.mxu0 0
  %996 = vmatprep.subr.bf16.mxu0 0
  %997 = vmatpush2.bf16.msra.mxu0 0
  %998 = vmatprep.subr.bf16.mxu0 0
  %999 = vmatpush2.bf16.msra.mxu0 0
  %1000 = vmatprep.mubr.bf16.mxu0 0
  %1001 = vmatmul.mubr.bf16.gmra.mxu0 %v963
  %v1002 = vpop.f32.mrf.mxu0
  %v1003 = vadd.f32 0.0, %v1002
  %v1004 = vpop.f32.mrf.mxu0
  %v1005 = vpop.f32.mrf.mxu0
  %v1006 = vpop.f32.mrf.mxu0
  %1007 = vdwg.mxu0
  %v1008 = vld [vmem:[%s2 + $0x58] sm:$0xff]
  %v1009 = vld [vmem:[%s3 + $0x58] sm:$0xff]
  %1010 = vadd.xlane.f32.xlu0 %v1003
  %v1011 = vpop.xlane.xlu0 %1010
  %v1012 = vmul.f32 %v1011, 0.0078125
  %v1013 = vsub.f32 %v1003, %v1012
  %v1014 = vmul.f32 %v1013, %v1013
  %1015 = vadd.xlane.f32.xlu0 %v1014
  %v1016 = vpop.xlane.xlu0 %1015
  %v1017 = vmul.f32 %v1016, 0.0078125
  %v1018 = vadd.f32 %v1017, 1e-05
  %v1019 = vrsqrt.pop %v1018
  %v1020 = vmul.f32 %v1019, %v1008
  %1022 = vset.pattern.permute.xlu0 0
  %1023 = vperm.xlu0 %1022, %v1020
  %v1024 = vpop.permute.xlu0 %1023
  %v1026 = vmul.f32 %v1013, %v1024
  %1028 = vset.pattern.permute.xlu0 0
  %1029 = vperm.xlu0 %1028, %v1009
  %v1030 = vpop.permute.xlu0 %1029
  %v1032 = vadd.f32 %v1026, %v1030
  %v1033 = vmax.f32 %v1032, 0.0
  %1034 = vrot.lane.b32.xlu0 %v1033, 9
  %v1035 = vpop.permute.xlu0 %1034
  %v1036 = vmul.f32 %v1035, %v58
  %1037 = vrot.lane.b32.xlu0 %v1033, 8
  %v1038 = vpop.permute.xlu0 %1037
  %v1039 = vmul.f32 %v1038, %v65
  %1040 = vrot.lane.b32.xlu0 %v1033, 7
  %v1041 = vpop.permute.xlu0 %1040
  %v1042 = vmul.f32 %v1041, %v72
  %1043 = vrot.lane.b32.xlu0 %v1033, 1
  %v1044 = vpop.permute.xlu0 %1043
  %v1045 = vmul.f32 %v1044, %v79
  %1046 = vrot.lane.b32.xlu0 %v1033, 127
  %v1047 = vpop.permute.xlu0 %1046
  %v1048 = vmul.f32 %v1047, %v86
  %1049 = vrot.lane.b32.xlu0 %v1033, 121
  %v1050 = vpop.permute.xlu0 %1049
  %v1051 = vmul.f32 %v1050, %v93
  %1052 = vrot.lane.b32.xlu0 %v1033, 120
  %v1053 = vpop.permute.xlu0 %1052
  %v1054 = vmul.f32 %v1053, %v100
  %1055 = vrot.lane.b32.xlu0 %v1033, 119
  %v1056 = vpop.permute.xlu0 %1055
  %v1057 = vmul.f32 %v1056, %v107
  %v1058 = vpack.c.bf16 %v1039, %v1036
  %v1059 = vpack.c.bf16 %v1045, %v1042
  %v1060 = vpack.c.bf16 %v1048, %v1033
  %v1061 = vpack.c.bf16 %v1054, %v1051
  %v1062 = vpack.c.bf16 %v1057, %v1057
  %s1063 = scalar_lea.vmem %s1, 36
  %v1064 = vld [vmem:[%s1063] sm:$0xf]
  %v1066 = vsel %vm234, %v1064, 0
  %v1069 = vsel %vm26, %v1062, 0
  %1071 = vmatprep.subr.bf16.mxu0 0
  %1072 = vmatpush1.bf16.msra.mxu0 0
  %1073 = vmatprep.subr.bf16.mxu0 0
  %1074 = vmatpush1.bf16.msra.mxu0 0
  %1075 = vmatprep.subr.bf16.mxu0 0
  %1076 = vmatpush1.bf16.msra.mxu0 0
  %1077 = vmatprep.subr.bf16.mxu0 0
  %1078 = vmatpush1.bf16.msra.mxu0 %v1069
  %1079 = vmatprep.subr.bf16.mxu0 0
  %1080 = vmatpush1.bf16.msra.mxu0 %v1061
  %1081 = vmatprep.subr.bf16.mxu0 0
  %1082 = vmatpush1.bf16.msra.mxu0 %v1060
  %1083 = vmatprep.subr.bf16.mxu0 0
  %1084 = vmatpush1.bf16.msra.mxu0 %v1059
  %1085 = vmatprep.subr.bf16.mxu0 0
  %1086 = vmatpush1.bf16.msra.mxu0 %v1058
  %1087 = vmatprep.subr.bf16.mxu0 0
  %1088 = vmatpush2.bf16.msra.mxu0 0
  %1089 = vmatprep.subr.bf16.mxu0 0
  %1090 = vmatpush2.bf16.msra.mxu0 0
  %1091 = vmatprep.subr.bf16.mxu0 0
  %1092 = vmatpush2.bf16.msra.mxu0 0
  %1093 = vmatprep.subr.bf16.mxu0 0
  %1094 = vmatpush2.bf16.msra.mxu0 0
  %1095 = vmatprep.subr.bf16.mxu0 0
  %1096 = vmatpush2.bf16.msra.mxu0 0
  %1097 = vmatprep.subr.bf16.mxu0 0
  %1098 = vmatpush2.bf16.msra.mxu0 0
  %1099 = vmatprep.subr.bf16.mxu0 0
  %1100 = vmatpush2.bf16.msra.mxu0 0
  %1101 = vmatprep.subr.bf16.mxu0 0
  %1102 = vmatpush2.bf16.msra.mxu0 0
  %1103 = vmatprep.mubr.bf16.mxu0 0
  %1104 = vmatmul.mubr.bf16.gmra.mxu0 %v1066
  %v1105 = vpop.f32.mrf.mxu0
  %v1106 = vadd.f32 %v900, %v1105
  %v1107 = vpop.f32.mrf.mxu0
  %v1108 = vpop.f32.mrf.mxu0
  %v1109 = vpop.f32.mrf.mxu0
  %1110 = vdwg.mxu0
  %v1111 = vld [vmem:[%s2 + $0x60] sm:$0xff]
  %v1112 = vld [vmem:[%s2 + $0x68] sm:$0xff]
  %v1113 = vld [vmem:[%s2 + $0x70] sm:$0xff]
  %v1114 = vld [vmem:[%s2 + $0x78] sm:$0xff]
  %v1115 = vld [vmem:[%s3 + $0x60] sm:$0xff]
  %v1116 = vld [vmem:[%s3 + $0x68] sm:$0xff]
  %v1117 = vld [vmem:[%s3 + $0x70] sm:$0xff]
  %v1118 = vld [vmem:[%s3 + $0x78] sm:$0xff]
  %1119 = vadd.xlane.f32.xlu0 %v1106
  %v1120 = vpop.xlane.xlu0 %1119
  %v1121 = vmul.f32 %v1120, 0.0078125
  %v1122 = vsub.f32 %v1106, %v1121
  %v1123 = vmul.f32 %v1122, %v1122
  %1124 = vadd.xlane.f32.xlu0 %v1123
  %v1125 = vpop.xlane.xlu0 %1124
  %v1126 = vmul.f32 %v1125, 0.0078125
  %v1127 = vadd.f32 %v1126, 1e-05
  %v1128 = vrsqrt.pop %v1127
  %v1129 = vmul.f32 %v916, %v1111
  %v1130 = vmul.f32 %v1128, %v1112
  %v1131 = vmul.f32 %v188, %v1113
  %v1132 = vmul.f32 %v710, %v1114
  %1134 = vset.pattern.permute.xlu0 0
  %1135 = vperm.xlu0 %1134, %v1129
  %v1136 = vpop.permute.xlu0 %1135
  %1139 = vset.pattern.permute.xlu0 0
  %1140 = vperm.xlu0 %1139, %v1130
  %v1141 = vpop.permute.xlu0 %1140
  %1144 = vset.pattern.permute.xlu0 0
  %1145 = vperm.xlu0 %1144, %v1131
  %v1146 = vpop.permute.xlu0 %1145
  %1149 = vset.pattern.permute.xlu0 0
  %1150 = vperm.xlu0 %1149, %v1132
  %v1151 = vpop.permute.xlu0 %1150
  %v1153 = vmul.f32 %v910, %v1136
  %v1154 = vmul.f32 %v1122, %v1141
  %v1155 = vmul.f32 %v182, %v1146
  %v1156 = vmul.f32 %v704, %v1151
  %1158 = vset.pattern.permute.xlu0 0
  %1159 = vperm.xlu0 %1158, %v1115
  %v1160 = vpop.permute.xlu0 %1159
  %1163 = vset.pattern.permute.xlu0 0
  %1164 = vperm.xlu0 %1163, %v1116
  %v1165 = vpop.permute.xlu0 %1164
  %1168 = vset.pattern.permute.xlu0 0
  %1169 = vperm.xlu0 %1168, %v1117
  %v1170 = vpop.permute.xlu0 %1169
  %1173 = vset.pattern.permute.xlu0 0
  %1174 = vperm.xlu0 %1173, %v1118
  %v1175 = vpop.permute.xlu0 %1174
  %v1177 = vadd.f32 %v1153, %v1160
  %v1178 = vadd.f32 %v1154, %v1165
  %v1179 = vadd.f32 %v1155, %v1170
  %v1180 = vadd.f32 %v1156, %v1175
  %v1181 = vmax.f32 %v1177, 0.0
  %v1182 = vmax.f32 %v1178, 0.0
  %v1183 = vmax.f32 %v1179, 0.0
  %v1184 = vmax.f32 %v1180, 0.0
  %s1185 = scalar_lea.vmem %s1, 40
  %v1186 = vld [vmem:[%s1185] sm:$0xf]
  %v1187 = vpack.c.bf16 %v1182, %v1181
  %v1188 = vpack.c.bf16 %v1184, %v1183
  %vm1189 = vcmask 261120
  %v1191 = vsel %vm1189, %v1186, 0
  %1193 = vmatprep.subr.bf16.mxu0 0
  %1194 = vmatpush1.bf16.msra.mxu0 0
  %1195 = vmatprep.subr.bf16.mxu0 0
  %1196 = vmatpush1.bf16.msra.mxu0 0
  %1197 = vmatprep.subr.bf16.mxu0 0
  %1198 = vmatpush1.bf16.msra.mxu0 0
  %1199 = vmatprep.subr.bf16.mxu0 0
  %1200 = vmatpush1.bf16.msra.mxu0 0
  %1201 = vmatprep.subr.bf16.mxu0 0
  %1202 = vmatpush1.bf16.msra.mxu0 0
  %1203 = vmatprep.subr.bf16.mxu0 0
  %1204 = vmatpush1.bf16.msra.mxu0 0
  %1205 = vmatprep.subr.bf16.mxu0 0
  %1206 = vmatpush1.bf16.msra.mxu0 %v1188
  %1207 = vmatprep.subr.bf16.mxu0 0
  %1208 = vmatpush1.bf16.msra.mxu0 %v1187
  %1209 = vmatprep.subr.bf16.mxu0 0
  %1210 = vmatpush2.bf16.msra.mxu0 0
  %1211 = vmatprep.subr.bf16.mxu0 0
  %1212 = vmatpush2.bf16.msra.mxu0 0
  %1213 = vmatprep.subr.bf16.mxu0 0
  %1214 = vmatpush2.bf16.msra.mxu0 0
  %1215 = vmatprep.subr.bf16.mxu0 0
  %1216 = vmatpush2.bf16.msra.mxu0 0
  %1217 = vmatprep.subr.bf16.mxu0 0
  %1218 = vmatpush2.bf16.msra.mxu0 0
  %1219 = vmatprep.subr.bf16.mxu0 0
  %1220 = vmatpush2.bf16.msra.mxu0 0
  %1221 = vmatprep.subr.bf16.mxu0 0
  %1222 = vmatpush2.bf16.msra.mxu0 0
  %1223 = vmatprep.subr.bf16.mxu0 0
  %1224 = vmatpush2.bf16.msra.mxu0 0
  %1225 = vmatprep.mubr.bf16.mxu0 0
  %1226 = vmatmul.mubr.bf16.gmra.mxu0 %v1191
  %v1227 = vpop.f32.mrf.mxu0
  %v1228 = vadd.f32 0.0, %v1227
  %v1229 = vpop.f32.mrf.mxu0
  %v1230 = vpop.f32.mrf.mxu0
  %v1231 = vpop.f32.mrf.mxu0
  %1232 = vdwg.mxu0
  %v1233 = vld [vmem:[%s2 + $0x80] sm:$0xff]
  %v1234 = vld [vmem:[%s3 + $0x80] sm:$0xff]
  %1235 = vadd.xlane.f32.xlu0 %v1228
  %v1236 = vpop.xlane.xlu0 %1235
  %v1237 = vmul.f32 %v1236, 0.0078125
  %v1238 = vsub.f32 %v1228, %v1237
  %v1239 = vmul.f32 %v1238, %v1238
  %1240 = vadd.xlane.f32.xlu0 %v1239
  %v1241 = vpop.xlane.xlu0 %1240
  %v1242 = vmul.f32 %v1241, 0.0078125
  %v1243 = vadd.f32 %v1242, 1e-05
  %v1244 = vrsqrt.pop %v1243
  %v1245 = vmul.f32 %v1244, %v1233
  %1247 = vset.pattern.permute.xlu0 0
  %1248 = vperm.xlu0 %1247, %v1245
  %v1249 = vpop.permute.xlu0 %1248
  %v1251 = vmul.f32 %v1238, %v1249
  %1253 = vset.pattern.permute.xlu0 0
  %1254 = vperm.xlu0 %1253, %v1234
  %v1255 = vpop.permute.xlu0 %1254
  %v1257 = vadd.f32 %v1251, %v1255
  %v1258 = vmax.f32 %v1257, 0.0
  %1259 = vrot.lane.b32.xlu0 %v1258, 9
  %v1260 = vpop.permute.xlu0 %1259
  %v1261 = vmul.f32 %v1260, %v58
  %1262 = vrot.lane.b32.xlu0 %v1258, 8
  %v1263 = vpop.permute.xlu0 %1262
  %v1264 = vmul.f32 %v1263, %v65
  %1265 = vrot.lane.b32.xlu0 %v1258, 7
  %v1266 = vpop.permute.xlu0 %1265
  %v1267 = vmul.f32 %v1266, %v72
  %1268 = vrot.lane.b32.xlu0 %v1258, 1
  %v1269 = vpop.permute.xlu0 %1268
  %v1270 = vmul.f32 %v1269, %v79
  %1271 = vrot.lane.b32.xlu0 %v1258, 127
  %v1272 = vpop.permute.xlu0 %1271
  %v1273 = vmul.f32 %v1272, %v86
  %1274 = vrot.lane.b32.xlu0 %v1258, 121
  %v1275 = vpop.permute.xlu0 %1274
  %v1276 = vmul.f32 %v1275, %v93
  %1277 = vrot.lane.b32.xlu0 %v1258, 120
  %v1278 = vpop.permute.xlu0 %1277
  %v1279 = vmul.f32 %v1278, %v100
  %1280 = vrot.lane.b32.xlu0 %v1258, 119
  %v1281 = vpop.permute.xlu0 %1280
  %v1282 = vmul.f32 %v1281, %v107
  %v1283 = vpack.c.bf16 %v1264, %v1261
  %v1284 = vpack.c.bf16 %v1270, %v1267
  %v1285 = vpack.c.bf16 %v1273, %v1258
  %v1286 = vpack.c.bf16 %v1279, %v1276
  %v1287 = vpack.c.bf16 %v1282, %v1282
  %s1288 = scalar_lea.vmem %s1, 44
  %v1289 = vld [vmem:[%s1288] sm:$0x3]
  %v1291 = vsel %vm234, %v1289, 0
  %v1294 = vsel %vm26, %v1287, 0
  %1296 = vmatprep.subr.bf16.mxu0 0
  %1297 = vmatpush1.bf16.msra.mxu0 0
  %1298 = vmatprep.subr.bf16.mxu0 0
  %1299 = vmatpush1.bf16.msra.mxu0 0
  %1300 = vmatprep.subr.bf16.mxu0 0
  %1301 = vmatpush1.bf16.msra.mxu0 0
  %1302 = vmatprep.subr.bf16.mxu0 0
  %1303 = vmatpush1.bf16.msra.mxu0 %v1294
  %1304 = vmatprep.subr.bf16.mxu0 0
  %1305 = vmatpush1.bf16.msra.mxu0 %v1286
  %1306 = vmatprep.subr.bf16.mxu0 0
  %1307 = vmatpush1.bf16.msra.mxu0 %v1285
  %1308 = vmatprep.subr.bf16.mxu0 0
  %1309 = vmatpush1.bf16.msra.mxu0 %v1284
  %1310 = vmatprep.subr.bf16.mxu0 0
  %1311 = vmatpush1.bf16.msra.mxu0 %v1283
  %1312 = vmatprep.subr.bf16.mxu0 0
  %1313 = vmatpush2.bf16.msra.mxu0 0
  %1314 = vmatprep.subr.bf16.mxu0 0
  %1315 = vmatpush2.bf16.msra.mxu0 0
  %1316 = vmatprep.subr.bf16.mxu0 0
  %1317 = vmatpush2.bf16.msra.mxu0 0
  %1318 = vmatprep.subr.bf16.mxu0 0
  %1319 = vmatpush2.bf16.msra.mxu0 0
  %1320 = vmatprep.subr.bf16.mxu0 0
  %1321 = vmatpush2.bf16.msra.mxu0 0
  %1322 = vmatprep.subr.bf16.mxu0 0
  %1323 = vmatpush2.bf16.msra.mxu0 0
  %1324 = vmatprep.subr.bf16.mxu0 0
  %1325 = vmatpush2.bf16.msra.mxu0 0
  %1326 = vmatprep.subr.bf16.mxu0 0
  %1327 = vmatpush2.bf16.msra.mxu0 0
  %1328 = vmatprep.mubr.bf16.mxu0 0
  %1329 = vmatmul.mubr.bf16.gmra.mxu0 %v1291
  %v1330 = vpop.f32.mrf.mxu0
  %v1331 = vadd.f32 %v23, %v1330
  %v1332 = vpop.f32.mrf.mxu0
  %v1333 = vpop.f32.mrf.mxu0
  %v1334 = vpop.f32.mrf.mxu0
  %1335 = vdwg.mxu0
  %1336 = vst [vmem:[%s5] sm:$0xf] %v1331
  // Predicated region
  $region22: #{memnet_forward.1} parent=0 // pred_check
    _
  $region23: #{memnet_forward.1} parent=0 // pred_check_branch
    %1338 = sbr.rel (0) target = $region25
  $region24: #{memnet_forward.1} parent=0 // pred_region
    _
  $region25: #{memnet_forward.1} parent=0 // pred_fallthru
    _
  // Predicated region
  $region26: #{memnet_forward.1} parent=0 // pred_check
    _
  $region27: #{memnet_forward.1} parent=0 // pred_check_branch
    %1340 = sbr.rel (0) target = $region29
  $region28: #{memnet_forward.1} parent=0 // pred_region
    _
  $region29: #{memnet_forward.1} parent=0 // pred_fallthru
    _

</llo_original>
